<compile_context>
chip_gen: v5e
topology: v5e:2x2
jax: 0.10.0
libtpu: 0.0.40
codegen_flags: <defaults>
</compile_context>

<pallas_src>
import jax
import jax.numpy as jnp
from jax.experimental import pallas as pl
from jax.experimental.pallas import tpu as pltpu


def _round_up(x, m):
    return ((x + m - 1) // m) * m


def _make_kernel(layer_dims, in_features, T, NB, interior_off, head_w,
                 compute_dtype):
    """layer_dims: list of (cin_pad, cout_pad, K) per conv layer."""
    n_layers = len(layer_dims)

    def kernel(*refs):
        x_ref = refs[0]
        conv_refs = refs[1:1 + 2 * n_layers]            # (w0,b0,w1,b1,...)
        wh_ref, bh_ref, mask_ref = refs[1 + 2 * n_layers:4 + 2 * n_layers]
        out_ref = refs[4 + 2 * n_layers]
        xpad_ref = refs[5 + 2 * n_layers]               # VMEM (NB, rows, Cpad) bf16

        # Zero the whole padded scratch every grid step.  Required for
        # correctness: halo rows supply the conv zero padding and padded lane
        # columns must hold finite values (their weight rows are zero).
        # Do NOT gate this on program_id == 0 -- scratch is per-TensorCore
        # under megacore.
        xpad_ref[...] = jnp.zeros_like(xpad_ref)

        # Layer-0 input (f32 from HBM) -> bf16 scratch interior.
        xpad_ref[:, interior_off:interior_off + T, :in_features] = (
            x_ref[...].astype(compute_dtype))

        feat = None                                     # (NB*T, cout_pad) bf16
        for li, (cin_pad, cout_pad, K) in enumerate(layer_dims):
            w_ref = conv_refs[2 * li]                   # (K, cin_pad, cout_pad) bf16
            b_ref = conv_refs[2 * li + 1]               # (1, cout_pad) f32
            if li > 0:
                # previous activation -> scratch interior for this layer
                xpad_ref[:, interior_off:interior_off + T, :cin_pad] = (
                    feat.reshape(NB, T, cin_pad))

            P = K // 2
            base = interior_off - P
            acc = None
            # K per-tap matmuls over 128-lane-aligned taps: no lane-axis
            # concatenate / lane shifting; f32 accumulation on the MXU path.
            for k in range(K):
                xk = xpad_ref[:, base + k: base + k + T, :cin_pad]
                xk = xk.reshape(NB * T, cin_pad)
                d = jnp.dot(xk, w_ref[k], preferred_element_type=jnp.float32)
                acc = d if acc is None else acc + d
            # Bias add / ReLU kept in f32 (v5e VPU has no bf16 support).
            feat_f32 = jnp.maximum(acc + b_ref[...], 0.0)
            feat = feat_f32.astype(compute_dtype)

        # Fused cls + att head, narrow (class_num+1)-lane output.
        head = jnp.dot(feat, wh_ref[...],
                       preferred_element_type=jnp.float32) + bh_ref[...]
        # Sigmoid applied only to the att column via a precomputed f32 mask
        # (no per-step iota + compare).
        head = head + mask_ref[...] * (jax.nn.sigmoid(head) - head)
        out_ref[...] = head.reshape(NB, T, head_w).astype(out_ref.dtype)

    return kernel


def backbone_net1_pallas(x_nct, params, layer_params, class_num,
                         compute_dtype=jnp.bfloat16):
    """x_nct: (N, C_in, T) float32 (PyTorch Conv1d layout).
    Returns (cls_score (N, T, class_num), att_weight (N, T, 1))."""
    N, C_in, T = x_nct.shape
    # TODO(synk): even kernel sizes change the Conv1d output length (T+1 per
    # even-K layer in PyTorch with padding=K//2); only odd K is supported here.
    assert all(int(k) % 2 == 1 for (_, k) in layer_params), "odd K only"
    assert class_num >= 1

    # TODO(synk): if the wrapper transpose shows in the profile, fold it into
    # the kernel (XLU has slack) or have the producer emit NTC directly.
    x = jnp.transpose(x_nct, (0, 2, 1))                      # (N, T, C_in)

    # ---- NB / grid selection ---------------------------------------------
    # Target >= 256 MXU rows per step (ideally 512-1024).  Do not split a
    # small batch just to manufacture grid steps: single-TC v5e/v6e gain
    # nothing, and v7x megacore only pays off with >= 2 pipelined steps/core.
    divisors = [d for d in range(1, N + 1) if N % d == 0]
    cands = [d for d in divisors if d * T >= 256]
    if cands:
        pref = [d for d in cands if 512 <= d * T <= 1024]
        NB = min(pref) if pref else min(cands)
    else:
        NB = N
    grid = N // NB

    # ---- padding geometry ---------------------------------------------------
    pad_max = max(int(k) // 2 for (_, k) in layer_params)
    interior_off = _round_up(pad_max, 8) if pad_max > 0 else 0
    rows = interior_off + T + pad_max
    chans = [C_in] + [int(c) for (c, _) in layer_params]
    c_scratch = _round_up(max(chans), 128)
    head_w = class_num + 1                                   # narrow fused (cls|att)

    # ---- pack weights: bf16 weights (pre-cast in XLA), f32 biases ----------
    layer_dims = []
    conv_arrays = []
    cin = C_in
    for (w, b) in params["convs"]:                           # w:(K,Cin,Cout) b:(1,Cout)
        K, cin_l, cout_l = w.shape
        assert cin_l == cin
        cin_pad = _round_up(cin_l, 128)
        cout_pad = _round_up(cout_l, 128)
        wp = jnp.zeros((K, cin_pad, cout_pad), jnp.float32)
        wp = wp.at[:, :cin_l, :cout_l].set(w)
        bp = jnp.zeros((1, cout_pad), jnp.float32).at[:, :cout_l].set(b)
        conv_arrays += [wp.astype(compute_dtype), bp]
        layer_dims.append((cin_pad, cout_pad, int(K)))
        cin = cout_l
    c_last = cin
    c_last_pad = layer_dims[-1][1]

    wc, bc = params["cls_head"]                              # (C_last, cls), (1, cls)
    wa, ba = params["att_head"]                              # (C_last, 1), (1, 1)
    wh = jnp.zeros((c_last_pad, head_w), jnp.float32)
    wh = wh.at[:c_last, :class_num].set(wc).at[:c_last, class_num:].set(wa)
    bh = jnp.zeros((1, head_w), jnp.float32)
    bh = bh.at[:, :class_num].set(bc).at[:, class_num:].set(ba)
    sig_mask = jnp.zeros((1, head_w), jnp.float32).at[:, class_num].set(1.0)
    head_arrays = [wh.astype(compute_dtype), bh, sig_mask]

    kernel = _make_kernel(layer_dims, C_in, T, NB, interior_off, head_w,
                          compute_dtype)

    def const_spec(arr):
        nd = arr.ndim
        # Grid-invariant block (constant index_map).  pl.Buffered(1) would
        # drop its second buffer; negligible at these channel widths.
        return pl.BlockSpec(arr.shape, lambda n, _nd=nd: (0,) * _nd)

    in_specs = [pl.BlockSpec((NB, T, C_in), lambda n: (n, 0, 0))]
    in_specs += [const_spec(a) for a in conv_arrays]
    in_specs += [const_spec(a) for a in head_arrays]

    out_shape = jax.ShapeDtypeStruct((N, T, head_w), jnp.float32)
    out_spec = pl.BlockSpec((NB, T, head_w), lambda n: (n, 0, 0))

    # ---- explicit VMEM budget (v7x: 64 MiB physical, keep headroom) --------
    scratch_bytes = NB * rows * c_scratch * 2
    in_bytes = 2 * NB * T * C_in * 4
    out_bytes = 2 * NB * T * head_w * 4
    wt_bytes = 2 * sum(int(a.size) * a.dtype.itemsize
                       for a in conv_arrays + head_arrays)
    tmp_bytes = 4 * NB * T * c_scratch * 4                   # xk/acc/feat temps
    est = scratch_bytes + in_bytes + out_bytes + wt_bytes + tmp_bytes
    vmem_limit = int(min(max(2 * est + (4 << 20), 16 << 20), 48 << 20))

    fn = pl.pallas_call(
        kernel,
        out_shape=out_shape,
        grid_spec=pltpu.PrefetchScalarGridSpec(
            num_scalar_prefetch=0,
            grid=(grid,),
            in_specs=in_specs,
            out_specs=out_spec,
            scratch_shapes=[pltpu.VMEM((NB, rows, c_scratch), compute_dtype)],
        ),
        compiler_params=pltpu.CompilerParams(
            dimension_semantics=("parallel",),
            vmem_limit_bytes=vmem_limit,
        ),
    )
    fused = fn(x, *conv_arrays, *head_arrays)                # (N, T, cls+1) f32
    cls_score = fused[..., :class_num]
    att_weight = fused[..., class_num:class_num + 1]
    return cls_score, att_weight


def init_params(key, in_features, class_num, layer_params):
    """Deterministic synthetic parameters (shapes match the PyTorch module)."""
    params = {"convs": []}
    cin = in_features
    for (cout, ksize) in layer_params:
        key, kw, kb = jax.random.split(key, 3)
        # stored as (K, Cin, Cout); PyTorch stores (Cout, Cin, K)
        w = jax.random.normal(kw, (ksize, cin, cout), jnp.float32) * 0.1
        b = jax.random.normal(kb, (1, cout), jnp.float32) * 0.1
        params["convs"].append((w, b))
        cin = cout
    key, kw, kb = jax.random.split(key, 3)
    wc = jax.random.normal(kw, (cin, class_num), jnp.float32) * 0.1
    bc = jax.random.normal(kb, (1, class_num), jnp.float32) * 0.1
    params["cls_head"] = (wc, bc)
    key, kw, kb = jax.random.split(key, 3)
    wa = jax.random.normal(kw, (cin, 1), jnp.float32) * 0.1
    ba = jax.random.normal(kb, (1, 1), jnp.float32) * 0.1
    params["att_head"] = (wa, ba)
    return params


def reference_forward(x_nct, params, layer_params):
    """Pure-JAX f32 reference matching the PyTorch forward semantics."""
    feat = x_nct                                             # (N, C, T)
    for (w, b) in params["convs"]:
        wt = jnp.transpose(w, (2, 1, 0))                     # (Cout, Cin, K)
        K = wt.shape[2]
        feat = jax.lax.conv_general_dilated(
            feat, wt, window_strides=(1,), padding=[(K // 2, K // 2)],
            dimension_numbers=("NCH", "OIH", "NCH"))
        feat = feat + b[0][None, :, None]
        feat = jnp.maximum(feat, 0.0)
    feat = jnp.transpose(feat, (0, 2, 1))                    # (N, T, C)
    wc, bc = params["cls_head"]
    wa, ba = params["att_head"]
    cls = feat @ wc + bc
    att = jax.nn.sigmoid(feat @ wa + ba)
    return cls, att


if __name__ == "__main__":
    # Small shapes consistent with the module: Conv1d stack over (N, C_in, T).
    N, C_in, T = 4, 4, 16
    class_num = 5
    layer_params = [[8, 3], [16, 3]]

    key = jax.random.PRNGKey(0)
    key, kx = jax.random.split(key)
    x = jax.random.normal(kx, (N, C_in, T), jnp.float32)

    params = init_params(key, C_in, class_num, layer_params)

    cls_score, att_weight = backbone_net1_pallas(
        x, params, layer_params, class_num, compute_dtype=jnp.bfloat16)
    cls_score = jax.block_until_ready(cls_score)
    att_weight = jax.block_until_ready(att_weight)

    # Silent numerical check against a pure-JAX f32 reference
    # (bf16 MXU operands -> loose tolerance).
    cls_ref, att_ref = reference_forward(x, params, layer_params)
    assert cls_score.shape == (N, T, class_num)
    assert att_weight.shape == (N, T, 1)
    assert jnp.allclose(cls_score, cls_ref, atol=2e-2, rtol=2e-2)
    assert jnp.allclose(att_weight, att_ref, atol=2e-2, rtol=2e-2)

    print("KERNEL_OK")
</pallas_src>

<mosaic_0001>
module attributes {stable_mosaic.version = 11 : i64} {
  func.func @kernel(%arg0: i32, %arg1: memref<4x16x4xf32, #tpu.memory_space<vmem>>, %arg2: memref<3x128x128xbf16, #tpu.memory_space<vmem>>, %arg3: memref<1x128xf32, #tpu.memory_space<vmem>>, %arg4: memref<3x128x128xbf16, #tpu.memory_space<vmem>>, %arg5: memref<1x128xf32, #tpu.memory_space<vmem>>, %arg6: memref<128x6xbf16, #tpu.memory_space<vmem>>, %arg7: memref<1x6xf32, #tpu.memory_space<vmem>>, %arg8: memref<1x6xf32, #tpu.memory_space<vmem>>, %arg9: memref<4x16x6xf32, #tpu.memory_space<vmem>>, %arg10: memref<4x25x128xbf16, #tpu.memory_space<vmem>>) attributes {dimension_semantics = [#tpu.dimension_semantics<parallel>], iteration_bounds = array<i64: 1>, scalar_prefetch = 0 : i64, scratch_operands = 1 : i64, tpu.core_type = #tpu.core_type<tc>, window_params = [{transform_indices = @transform_0, window_bounds = array<i64: 4, 16, 4>}, {pipeline_mode = #tpu.pipeline_mode<synchronous>, transform_indices = @transform_1, window_bounds = array<i64: 3, 128, 128>}, {pipeline_mode = #tpu.pipeline_mode<synchronous>, transform_indices = @transform_2, window_bounds = array<i64: 1, 128>}, {pipeline_mode = #tpu.pipeline_mode<synchronous>, transform_indices = @transform_3, window_bounds = array<i64: 3, 128, 128>}, {pipeline_mode = #tpu.pipeline_mode<synchronous>, transform_indices = @transform_4, window_bounds = array<i64: 1, 128>}, {pipeline_mode = #tpu.pipeline_mode<synchronous>, transform_indices = @transform_5, window_bounds = array<i64: 128, 6>}, {pipeline_mode = #tpu.pipeline_mode<synchronous>, transform_indices = @transform_6, window_bounds = array<i64: 1, 6>}, {pipeline_mode = #tpu.pipeline_mode<synchronous>, transform_indices = @transform_7, window_bounds = array<i64: 1, 6>}, {transform_indices = @transform_8, window_bounds = array<i64: 4, 16, 6>}]} {
    %cst = arith.constant 0.000000e+00 : bf16
    %0 = vector.broadcast %cst : bf16 to vector<4x25x128xbf16>
    %c0 = arith.constant 0 : index
    %c0_0 = arith.constant 0 : index
    %c0_1 = arith.constant 0 : index
    %1 = vector.load %arg10[%c0, %c0_0, %c0_1] : memref<4x25x128xbf16, #tpu.memory_space<vmem>>, vector<4x25x128xbf16>
    tpu.vector_store %arg10[%c0, %c0_0, %c0_1], %0 {strides = array<i32>} : memref<4x25x128xbf16, #tpu.memory_space<vmem>>, vector<4x25x128xbf16>,
    %c0_2 = arith.constant 0 : index
    %c0_3 = arith.constant 0 : index
    %c0_4 = arith.constant 0 : index
    %2 = vector.load %arg1[%c0_2, %c0_3, %c0_4] : memref<4x16x4xf32, #tpu.memory_space<vmem>>, vector<4x16x4xf32>
    %3 = arith.truncf %2 : vector<4x16x4xf32> to vector<4x16x4xbf16>
    %c0_5 = arith.constant 0 : index
    %c8 = arith.constant 8 : index
    %c0_6 = arith.constant 0 : index
    %4 = vector.load %arg10[%c0_5, %c8, %c0_6] : memref<4x25x128xbf16, #tpu.memory_space<vmem>>, vector<4x16x4xbf16>
    tpu.vector_store %arg10[%c0_5, %c8, %c0_6], %3 {strides = array<i32>} : memref<4x25x128xbf16, #tpu.memory_space<vmem>>, vector<4x16x4xbf16>,
    %c0_7 = arith.constant 0 : index
    %c7 = arith.constant 7 : index
    %c0_8 = arith.constant 0 : index
    %5 = vector.load %arg10[%c0_7, %c7, %c0_8] : memref<4x25x128xbf16, #tpu.memory_space<vmem>>, vector<4x16x128xbf16>
    %6 = vector.shape_cast %5 : vector<4x16x128xbf16> to vector<64x128xbf16>
    %c0_9 = arith.constant 0 : index
    %c0_10 = arith.constant 0 : index
    %c0_11 = arith.constant 0 : index
    %7 = vector.load %arg2[%c0_9, %c0_10, %c0_11] : memref<3x128x128xbf16, #tpu.memory_space<vmem>>, vector<1x128x128xbf16>
    %8 = vector.shape_cast %7 : vector<1x128x128xbf16> to vector<128x128xbf16>
    %cst_12 = arith.constant dense<0.000000e+00> : vector<64x128xf32>
    %9 = tpu.matmul %6, %8, %cst_12 {dimension_numbers = #tpu.dot_dimension_numbers<[1], [0], [0], [1], [0, 0, 1, 1], [], []>} : vector<64x128xbf16>, vector<128x128xbf16>, vector<64x128xf32> -> vector<64x128xf32>
    %c0_13 = arith.constant 0 : index
    %c8_14 = arith.constant 8 : index
    %c0_15 = arith.constant 0 : index
    %10 = vector.load %arg10[%c0_13, %c8_14, %c0_15] : memref<4x25x128xbf16, #tpu.memory_space<vmem>>, vector<4x16x128xbf16>
    %11 = vector.shape_cast %10 : vector<4x16x128xbf16> to vector<64x128xbf16>
    %c1 = arith.constant 1 : index
    %c0_16 = arith.constant 0 : index
    %c0_17 = arith.constant 0 : index
    %12 = vector.load %arg2[%c1, %c0_16, %c0_17] : memref<3x128x128xbf16, #tpu.memory_space<vmem>>, vector<1x128x128xbf16>
    %13 = vector.shape_cast %12 : vector<1x128x128xbf16> to vector<128x128xbf16>
    %cst_18 = arith.constant dense<0.000000e+00> : vector<64x128xf32>
    %14 = tpu.matmul %11, %13, %cst_18 {dimension_numbers = #tpu.dot_dimension_numbers<[1], [0], [0], [1], [0, 0, 1, 1], [], []>} : vector<64x128xbf16>, vector<128x128xbf16>, vector<64x128xf32> -> vector<64x128xf32>
    %15 = arith.addf %9, %14 : vector<64x128xf32>
    %c0_19 = arith.constant 0 : index
    %c9 = arith.constant 9 : index
    %c0_20 = arith.constant 0 : index
    %16 = vector.load %arg10[%c0_19, %c9, %c0_20] : memref<4x25x128xbf16, #tpu.memory_space<vmem>>, vector<4x16x128xbf16>
    %17 = vector.shape_cast %16 : vector<4x16x128xbf16> to vector<64x128xbf16>
    %c2 = arith.constant 2 : index
    %c0_21 = arith.constant 0 : index
    %c0_22 = arith.constant 0 : index
    %18 = vector.load %arg2[%c2, %c0_21, %c0_22] : memref<3x128x128xbf16, #tpu.memory_space<vmem>>, vector<1x128x128xbf16>
    %19 = vector.shape_cast %18 : vector<1x128x128xbf16> to vector<128x128xbf16>
    %cst_23 = arith.constant dense<0.000000e+00> : vector<64x128xf32>
    %20 = tpu.matmul %17, %19, %cst_23 {dimension_numbers = #tpu.dot_dimension_numbers<[1], [0], [0], [1], [0, 0, 1, 1], [], []>} : vector<64x128xbf16>, vector<128x128xbf16>, vector<64x128xf32> -> vector<64x128xf32>
    %21 = arith.addf %15, %20 : vector<64x128xf32>
    %c0_24 = arith.constant 0 : index
    %c0_25 = arith.constant 0 : index
    %22 = vector.load %arg3[%c0_24, %c0_25] : memref<1x128xf32, #tpu.memory_space<vmem>>, vector<1x128xf32>
    %23 = vector.broadcast %22 : vector<1x128xf32> to vector<64x128xf32>
    %24 = arith.addf %21, %23 : vector<64x128xf32>
    %cst_26 = arith.constant 0.000000e+00 : f32
    %25 = vector.broadcast %cst_26 : f32 to vector<64x128xf32>
    %26 = arith.maximumf %24, %25 : vector<64x128xf32>
    %27 = arith.truncf %26 : vector<64x128xf32> to vector<64x128xbf16>
    %28 = vector.shape_cast %27 : vector<64x128xbf16> to vector<4x16x128xbf16>
    %c0_27 = arith.constant 0 : index
    %c8_28 = arith.constant 8 : index
    %c0_29 = arith.constant 0 : index
    %29 = vector.load %arg10[%c0_27, %c8_28, %c0_29] : memref<4x25x128xbf16, #tpu.memory_space<vmem>>, vector<4x16x128xbf16>
    tpu.vector_store %arg10[%c0_27, %c8_28, %c0_29], %28 {strides = array<i32>} : memref<4x25x128xbf16, #tpu.memory_space<vmem>>, vector<4x16x128xbf16>,
    %c0_30 = arith.constant 0 : index
    %c7_31 = arith.constant 7 : index
    %c0_32 = arith.constant 0 : index
    %30 = vector.load %arg10[%c0_30, %c7_31, %c0_32] : memref<4x25x128xbf16, #tpu.memory_space<vmem>>, vector<4x16x128xbf16>
    %31 = vector.shape_cast %30 : vector<4x16x128xbf16> to vector<64x128xbf16>
    %c0_33 = arith.constant 0 : index
    %c0_34 = arith.constant 0 : index
    %c0_35 = arith.constant 0 : index
    %32 = vector.load %arg4[%c0_33, %c0_34, %c0_35] : memref<3x128x128xbf16, #tpu.memory_space<vmem>>, vector<1x128x128xbf16>
    %33 = vector.shape_cast %32 : vector<1x128x128xbf16> to vector<128x128xbf16>
    %cst_36 = arith.constant dense<0.000000e+00> : vector<64x128xf32>
    %34 = tpu.matmul %31, %33, %cst_36 {dimension_numbers = #tpu.dot_dimension_numbers<[1], [0], [0], [1], [0, 0, 1, 1], [], []>} : vector<64x128xbf16>, vector<128x128xbf16>, vector<64x128xf32> -> vector<64x128xf32>
    %c0_37 = arith.constant 0 : index
    %c8_38 = arith.constant 8 : index
    %c0_39 = arith.constant 0 : index
    %35 = vector.load %arg10[%c0_37, %c8_38, %c0_39] : memref<4x25x128xbf16, #tpu.memory_space<vmem>>, vector<4x16x128xbf16>
    %36 = vector.shape_cast %35 : vector<4x16x128xbf16> to vector<64x128xbf16>
    %c1_40 = arith.constant 1 : index
    %c0_41 = arith.constant 0 : index
    %c0_42 = arith.constant 0 : index
    %37 = vector.load %arg4[%c1_40, %c0_41, %c0_42] : memref<3x128x128xbf16, #tpu.memory_space<vmem>>, vector<1x128x128xbf16>
    %38 = vector.shape_cast %37 : vector<1x128x128xbf16> to vector<128x128xbf16>
    %cst_43 = arith.constant dense<0.000000e+00> : vector<64x128xf32>
    %39 = tpu.matmul %36, %38, %cst_43 {dimension_numbers = #tpu.dot_dimension_numbers<[1], [0], [0], [1], [0, 0, 1, 1], [], []>} : vector<64x128xbf16>, vector<128x128xbf16>, vector<64x128xf32> -> vector<64x128xf32>
    %40 = arith.addf %34, %39 : vector<64x128xf32>
    %c0_44 = arith.constant 0 : index
    %c9_45 = arith.constant 9 : index
    %c0_46 = arith.constant 0 : index
    %41 = vector.load %arg10[%c0_44, %c9_45, %c0_46] : memref<4x25x128xbf16, #tpu.memory_space<vmem>>, vector<4x16x128xbf16>
    %42 = vector.shape_cast %41 : vector<4x16x128xbf16> to vector<64x128xbf16>
    %c2_47 = arith.constant 2 : index
    %c0_48 = arith.constant 0 : index
    %c0_49 = arith.constant 0 : index
    %43 = vector.load %arg4[%c2_47, %c0_48, %c0_49] : memref<3x128x128xbf16, #tpu.memory_space<vmem>>, vector<1x128x128xbf16>
    %44 = vector.shape_cast %43 : vector<1x128x128xbf16> to vector<128x128xbf16>
    %cst_50 = arith.constant dense<0.000000e+00> : vector<64x128xf32>
    %45 = tpu.matmul %42, %44, %cst_50 {dimension_numbers = #tpu.dot_dimension_numbers<[1], [0], [0], [1], [0, 0, 1, 1], [], []>} : vector<64x128xbf16>, vector<128x128xbf16>, vector<64x128xf32> -> vector<64x128xf32>
    %46 = arith.addf %40, %45 : vector<64x128xf32>
    %c0_51 = arith.constant 0 : index
    %c0_52 = arith.constant 0 : index
    %47 = vector.load %arg5[%c0_51, %c0_52] : memref<1x128xf32, #tpu.memory_space<vmem>>, vector<1x128xf32>
    %48 = vector.broadcast %47 : vector<1x128xf32> to vector<64x128xf32>
    %49 = arith.addf %46, %48 : vector<64x128xf32>
    %cst_53 = arith.constant 0.000000e+00 : f32
    %50 = vector.broadcast %cst_53 : f32 to vector<64x128xf32>
    %51 = arith.maximumf %49, %50 : vector<64x128xf32>
    %52 = arith.truncf %51 : vector<64x128xf32> to vector<64x128xbf16>
    %c0_54 = arith.constant 0 : index
    %c0_55 = arith.constant 0 : index
    %53 = vector.load %arg6[%c0_54, %c0_55] : memref<128x6xbf16, #tpu.memory_space<vmem>>, vector<128x6xbf16>
    %cst_56 = arith.constant dense<0.000000e+00> : vector<64x6xf32>
    %54 = tpu.matmul %52, %53, %cst_56 {dimension_numbers = #tpu.dot_dimension_numbers<[1], [0], [0], [1], [0, 0, 1, 1], [], []>} : vector<64x128xbf16>, vector<128x6xbf16>, vector<64x6xf32> -> vector<64x6xf32>
    %c0_57 = arith.constant 0 : index
    %c0_58 = arith.constant 0 : index
    %55 = vector.load %arg7[%c0_57, %c0_58] : memref<1x6xf32, #tpu.memory_space<vmem>>, vector<1x6xf32>
    %56 = vector.broadcast %55 : vector<1x6xf32> to vector<64x6xf32>
    %57 = arith.addf %54, %56 : vector<64x6xf32>
    %c0_59 = arith.constant 0 : index
    %c0_60 = arith.constant 0 : index
    %58 = vector.load %arg8[%c0_59, %c0_60] : memref<1x6xf32, #tpu.memory_space<vmem>>, vector<1x6xf32>
    %59 = arith.negf %57 : vector<64x6xf32>
    %60 = math.exp %59 : vector<64x6xf32>
    %cst_61 = arith.constant 1.000000e+00 : f32
    %61 = vector.broadcast %cst_61 : f32 to vector<64x6xf32>
    %62 = arith.addf %61, %60 : vector<64x6xf32>
    %63 = arith.divf %61, %62 : vector<64x6xf32>
    %64 = arith.subf %63, %57 : vector<64x6xf32>
    %65 = vector.broadcast %58 : vector<1x6xf32> to vector<64x6xf32>
    %66 = arith.mulf %65, %64 : vector<64x6xf32>
    %67 = arith.addf %57, %66 : vector<64x6xf32>
    %68 = vector.shape_cast %67 : vector<64x6xf32> to vector<4x16x6xf32>
    %c0_62 = arith.constant 0 : index
    %c0_63 = arith.constant 0 : index
    %c0_64 = arith.constant 0 : index
    %69 = vector.load %arg9[%c0_62, %c0_63, %c0_64] : memref<4x16x6xf32, #tpu.memory_space<vmem>>, vector<4x16x6xf32>
    tpu.vector_store %arg9[%c0_62, %c0_63, %c0_64], %68 {strides = array<i32>} : memref<4x16x6xf32, #tpu.memory_space<vmem>>, vector<4x16x6xf32>,
    return
  }
  func.func @transform_0(%arg0: i32) -> (i32, i32, i32) {
    %c0_i32 = arith.constant 0 : i32
    %c0_i32_0 = arith.constant 0 : i32
    %c0_i32_1 = arith.constant 0 : i32
    return %arg0, %c0_i32, %c0_i32_0 : i32, i32, i32
  }
  func.func @transform_1(%arg0: i32) -> (i32, i32, i32) {
    %c0_i32 = arith.constant 0 : i32
    %c0_i32_0 = arith.constant 0 : i32
    %c0_i32_1 = arith.constant 0 : i32
    %c0_i32_2 = arith.constant 0 : i32
    return %c0_i32, %c0_i32_0, %c0_i32_1 : i32, i32, i32
  }
  func.func @transform_2(%arg0: i32) -> (i32, i32) {
    %c0_i32 = arith.constant 0 : i32
    %c0_i32_0 = arith.constant 0 : i32
    %c0_i32_1 = arith.constant 0 : i32
    return %c0_i32, %c0_i32_0 : i32, i32
  }
  func.func @transform_3(%arg0: i32) -> (i32, i32, i32) {
    %c0_i32 = arith.constant 0 : i32
    %c0_i32_0 = arith.constant 0 : i32
    %c0_i32_1 = arith.constant 0 : i32
    %c0_i32_2 = arith.constant 0 : i32
    return %c0_i32, %c0_i32_0, %c0_i32_1 : i32, i32, i32
  }
  func.func @transform_4(%arg0: i32) -> (i32, i32) {
    %c0_i32 = arith.constant 0 : i32
    %c0_i32_0 = arith.constant 0 : i32
    %c0_i32_1 = arith.constant 0 : i32
    return %c0_i32, %c0_i32_0 : i32, i32
  }
  func.func @transform_5(%arg0: i32) -> (i32, i32) {
    %c0_i32 = arith.constant 0 : i32
    %c0_i32_0 = arith.constant 0 : i32
    %c0_i32_1 = arith.constant 0 : i32
    return %c0_i32, %c0_i32_0 : i32, i32
  }
  func.func @transform_6(%arg0: i32) -> (i32, i32) {
    %c0_i32 = arith.constant 0 : i32
    %c0_i32_0 = arith.constant 0 : i32
    %c0_i32_1 = arith.constant 0 : i32
    return %c0_i32, %c0_i32_0 : i32, i32
  }
  func.func @transform_7(%arg0: i32) -> (i32, i32) {
    %c0_i32 = arith.constant 0 : i32
    %c0_i32_0 = arith.constant 0 : i32
    %c0_i32_1 = arith.constant 0 : i32
    return %c0_i32, %c0_i32_0 : i32, i32
  }
  func.func @transform_8(%arg0: i32) -> (i32, i32, i32) {
    %c0_i32 = arith.constant 0 : i32
    %c0_i32_0 = arith.constant 0 : i32
    %c0_i32_1 = arith.constant 0 : i32
    return %arg0, %c0_i32, %c0_i32_0 : i32, i32, i32
  }
}

</mosaic_0001>

<llo_original>
// kernel: tpu_custom_call.1
$region0: #{tpu_custom_call.1}
  #allocation0 [shape = 'u32[]', space=smem, size = 0x4, offset = 0x4, fixed_abs, tag = 'smem constant byte address 0x4 - core index']
  #allocation1 [shape = 'u32[72,128]{1,0:T(1,128)}', space=vmem, size = 0x9000, scoped, tag = 'internal scratch']
  #allocation2 [shape = 'bf16[4,25,128]{2,1,0:T(8,128)(2,1)}', space=vmem, size = 0x8000, scoped, tag = 'scratch operand']
  %s0 = inlined_call_operand.vmem [shape: f32[4,16,4], index: 0, kind: input, shape index: {}]
  %s1 = inlined_call_operand.hbm [shape: bf16[3,128,128], index: 1, kind: input, shape index: {}]
  %s2 = inlined_call_operand.vmem [shape: f32[1,128], index: 2, kind: input, shape index: {}]
  %s3 = inlined_call_operand.hbm [shape: bf16[3,128,128], index: 3, kind: input, shape index: {}]
  %s4 = inlined_call_operand.vmem [shape: f32[1,128], index: 4, kind: input, shape index: {}]
  %s5 = inlined_call_operand.vmem [shape: bf16[128,6], index: 5, kind: input, shape index: {}]
  %s6 = inlined_call_operand.vmem [shape: f32[1,6], index: 6, kind: input, shape index: {}]
  %s7 = inlined_call_operand.vmem [shape: f32[1,6], index: 7, kind: input, shape index: {}]
  %s8 = inlined_call_operand.vmem [shape: f32[4,16,6], index: 8, kind: output, shape index: {}]
  %s9 = sld [smem:[#allocation0]]
  $region50: #{tpu_custom_call.1} parent=0
    _
  %s11 = ssub.s32 1, %s9
  %s12 = scalar_select 0, %s11, %s9
  $region1: #{tpu_custom_call.1} parent=0
    #allocation3 [shape = 'u8[98304]{0}', space=vmem, size = 0x18000, scoped, tag = 'input window, operand 1, single buffered']
    #allocation4 [shape = 's32[1]{0}', space=sflag, size = 0x4, scoped, tag = 'scoped memory for tpu_custom_call.1']
    #allocation5 [shape = 'u8[98304]{0}', space=vmem, size = 0x18000, scoped, tag = 'input window, operand 3, single buffered']
    #allocation6 [shape = 's32[1]{0}', space=sflag, size = 0x4, scoped, tag = 'scoped memory for tpu_custom_call.1']
    %13 = vsyncpa [#allocation4], 0
    %14 = vsyncpa [#allocation6], 0
    // Predicated region
    $region2: #{tpu_custom_call.1} parent=1 // pred_check
      _
    $region3: #{tpu_custom_call.1} parent=1 // pred_check_branch
      %16 = sbr.rel (0) target = $region5
    $region4: #{tpu_custom_call.1} parent=1 // pred_region
      _
    $region5: #{tpu_custom_call.1} parent=1 // pred_fallthru
      _
    // Predicated region
    $region6: #{tpu_custom_call.1} parent=1 // pred_check
      _
    $region7: #{tpu_custom_call.1} parent=1 // pred_check_branch
      %18 = sbr.rel (0) target = $region9
    $region8: #{tpu_custom_call.1} parent=1 // pred_region
      %20 = vsyncadd [#allocation4], 0
      %s21 = sshll.u32 %s1, 4
      %s22 = int_to_ptr.hbm [resolvable:$true] %s21
      %s23 = sshll.u32 [#allocation3], 4
      %s24 = int_to_ptr.vmem [resolvable:$true] %s23
      %29 = dma.hbm_to_vmem [thread:$0]  %s22, 3072, %s24, [#allocation4], 64, 64, 4
    $region9: #{tpu_custom_call.1} parent=1 // pred_fallthru
      _
    // Predicated region
    $region10: #{tpu_custom_call.1} parent=1 // pred_check
      _
    $region11: #{tpu_custom_call.1} parent=1 // pred_check_branch
      %31 = sbr.rel (0) target = $region13
    $region12: #{tpu_custom_call.1} parent=1 // pred_region
      _
    $region13: #{tpu_custom_call.1} parent=1 // pred_fallthru
      _
    // Predicated region
    $region14: #{tpu_custom_call.1} parent=1 // pred_check
      _
    $region15: #{tpu_custom_call.1} parent=1 // pred_check_branch
      %33 = sbr.rel (0) target = $region17
    $region16: #{tpu_custom_call.1} parent=1 // pred_region
      %35 = vsyncadd [#allocation6], 0
      %s36 = sshll.u32 %s3, 4
      %s37 = int_to_ptr.hbm [resolvable:$true] %s36
      %s38 = sshll.u32 [#allocation5], 4
      %s39 = int_to_ptr.vmem [resolvable:$true] %s38
      %44 = dma.hbm_to_vmem [thread:$0]  %s37, 3072, %s39, [#allocation6], 64, 64, 4
    $region17: #{tpu_custom_call.1} parent=1 // pred_fallthru
      _
    // Predicated region
    $region18: #{tpu_custom_call.1} parent=1 // pred_check
      _
    $region19: #{tpu_custom_call.1} parent=1 // pred_check_branch
      %46 = sbr.rel (0) target = $region21
    $region20: #{tpu_custom_call.1} parent=1 // pred_region
      _
    $region21: #{tpu_custom_call.1} parent=1 // pred_fallthru
      _
    // Predicated region
    $region22: #{tpu_custom_call.1} parent=1 // pred_check
      _
    $region23: #{tpu_custom_call.1} parent=1 // pred_check_branch
      %48 = sbr.rel (0) target = $region25
    $region24: #{tpu_custom_call.1} parent=1 // pred_region
      _
    $region25: #{tpu_custom_call.1} parent=1 // pred_fallthru
      _
    // Predicated region
    $region26: #{tpu_custom_call.1} parent=1 // pred_check
      _
    $region27: #{tpu_custom_call.1} parent=1 // pred_check_branch
      %50 = sbr.rel (0) target = $region29
    $region28: #{tpu_custom_call.1} parent=1 // pred_region
      _
    $region29: #{tpu_custom_call.1} parent=1 // pred_fallthru
      _
    // Predicated region
    $region30: #{tpu_custom_call.1} parent=1 // pred_check
      _
    $region31: #{tpu_custom_call.1} parent=1 // pred_check_branch
      %52 = sbr.rel (0) target = $region33
    $region32: #{tpu_custom_call.1} parent=1 // pred_region
      _
    $region33: #{tpu_custom_call.1} parent=1 // pred_fallthru
      _
    // Predicated region
    $region34: #{tpu_custom_call.1} parent=1 // pred_check
      _
    $region35: #{tpu_custom_call.1} parent=1 // pred_check_branch
      %54 = sbr.rel (0) target = $region37
    $region36: #{tpu_custom_call.1} parent=1 // pred_region
      %56 = dma.done [#allocation4], 3072
    $region37: #{tpu_custom_call.1} parent=1 // pred_fallthru
      _
    // Predicated region
    $region38: #{tpu_custom_call.1} parent=1 // pred_check
      _
    $region39: #{tpu_custom_call.1} parent=1 // pred_check_branch
      %58 = sbr.rel (0) target = $region41
    $region40: #{tpu_custom_call.1} parent=1 // pred_region
      %60 = dma.done [#allocation6], 3072
    $region41: #{tpu_custom_call.1} parent=1 // pred_fallthru
      _
    %62 = vst [vmem:[#allocation2] sm:$0xf] 0
    %63 = vst [vmem:[#allocation2 + $0x4] sm:$0xf] 0
    %64 = vst [vmem:[#allocation2 + $0x8] sm:$0xf] 0
    %vm65 = vcmask 1040384
    %vm66 = vsmask.f32 256
    %vm67 = vmand %vm65, %vm66
    %v68 = vld [vmem:[#allocation2 + $0xc] sm:$0x1]
    %v69 = vsel %vm67, 0, %v68
    %70 = vst [vmem:[#allocation2 + $0xc] sm:$0x1] %v69
    %71 = vst [vmem:[#allocation2 + $0x10] sm:$0xf] 0
    %72 = vst [vmem:[#allocation2 + $0x14] sm:$0xf] 0
    %73 = vst [vmem:[#allocation2 + $0x18] sm:$0xf] 0
    %v74 = vld [vmem:[#allocation2 + $0x1c] sm:$0x1]
    %v75 = vsel %vm67, 0, %v74
    %76 = vst [vmem:[#allocation2 + $0x1c] sm:$0x1] %v75
    %77 = vst [vmem:[#allocation2 + $0x20] sm:$0xf] 0
    %78 = vst [vmem:[#allocation2 + $0x24] sm:$0xf] 0
    %79 = vst [vmem:[#allocation2 + $0x28] sm:$0xf] 0
    %v80 = vld [vmem:[#allocation2 + $0x2c] sm:$0x1]
    %v81 = vsel %vm67, 0, %v80
    %82 = vst [vmem:[#allocation2 + $0x2c] sm:$0x1] %v81
    %83 = vst [vmem:[#allocation2 + $0x30] sm:$0xf] 0
    %84 = vst [vmem:[#allocation2 + $0x34] sm:$0xf] 0
    %85 = vst [vmem:[#allocation2 + $0x38] sm:$0xf] 0
    %v86 = vld [vmem:[#allocation2 + $0x3c] sm:$0x1]
    %v87 = vsel %vm67, 0, %v86
    %88 = vst [vmem:[#allocation2 + $0x3c] sm:$0x1] %v87
    %v89 = vld [vmem:[%s0] sm:$0xff]
    %v90 = vld [vmem:[%s0 + $0x8] sm:$0xff]
    %v91 = vld [vmem:[%s0 + $0x10] sm:$0xff]
    %v92 = vld [vmem:[%s0 + $0x18] sm:$0xff]
    %v93 = vld [vmem:[%s0 + $0x20] sm:$0xff]
    %v94 = vld [vmem:[%s0 + $0x28] sm:$0xff]
    %v95 = vld [vmem:[%s0 + $0x30] sm:$0xff]
    %v96 = vld [vmem:[%s0 + $0x38] sm:$0xff]
    %v97 = vpack.c.bf16 %v89, %v89
    %v98 = vpack.c.bf16 %v90, %v90
    %v99 = vpack.c.bf16 %v91, %v91
    %v100 = vpack.c.bf16 %v92, %v92
    %v101 = vpack.c.bf16 %v93, %v93
    %v102 = vpack.c.bf16 %v94, %v94
    %v103 = vpack.c.bf16 %v95, %v95
    %v104 = vpack.c.bf16 %v96, %v96
    %vm105 = vcmask 27648
    %106 = vst.msk [vmem:[#allocation2 + $0x4] sm:$0xf] %vm105, %v97
    %107 = vst.msk [vmem:[#allocation2 + $0x8] sm:$0xf] %vm105, %v98
    %108 = vst.msk [vmem:[#allocation2 + $0x14] sm:$0xf] %vm105, %v99
    %109 = vst.msk [vmem:[#allocation2 + $0x18] sm:$0xf] %vm105, %v100
    %110 = vst.msk [vmem:[#allocation2 + $0x24] sm:$0xf] %vm105, %v101
    %111 = vst.msk [vmem:[#allocation2 + $0x28] sm:$0xf] %vm105, %v102
    %112 = vst.msk [vmem:[#allocation2 + $0x34] sm:$0xf] %vm105, %v103
    %113 = vst.msk [vmem:[#allocation2 + $0x38] sm:$0xf] %vm105, %v104
    %v114 = vld [vmem:[#allocation2] sm:$0x8]
    %v115 = vld [vmem:[#allocation2 + $0x4] sm:$0xf]
    %v116 = vld [vmem:[#allocation2 + $0x8] sm:$0xf]
    %v117 = vld [vmem:[#allocation2 + $0x10] sm:$0x8]
    %v118 = vld [vmem:[#allocation2 + $0x14] sm:$0xf]
    %v119 = vld [vmem:[#allocation2 + $0x18] sm:$0xf]
    %v120 = vld [vmem:[#allocation2 + $0x20] sm:$0x8]
    %v121 = vld [vmem:[#allocation2 + $0x24] sm:$0xf]
    %v122 = vld [vmem:[#allocation2 + $0x28] sm:$0xf]
    %v123 = vld [vmem:[#allocation2 + $0x30] sm:$0x8]
    %v124 = vld [vmem:[#allocation2 + $0x34] sm:$0xf]
    %v125 = vld [vmem:[#allocation2 + $0x38] sm:$0xf]
    %vm126 = vsmask.f32 4368
    %vm127 = vmor %vm66, %vm126
    %v129 = vshrl.u32 %v114, 16
    %v131 = vrot.slane %v129, 7
    %v132 = vrot.slane %v131, 4
    %v134 = vshrl.u32 %v115, 16
    %v136 = vrot.slane %v134, 7
    %v137 = vshll.u32 %v115, 16
    %v139 = vor.u32 %v136, %v137
    %v140 = vsel %vm127, %v132, %v139
    %v141 = vrot.slane %v136, 4
    %v143 = vshrl.u32 %v116, 16
    %v145 = vrot.slane %v143, 7
    %v146 = vshll.u32 %v116, 16
    %v148 = vor.u32 %v145, %v146
    %v149 = vsel %vm127, %v141, %v148
    %v151 = vshrl.u32 %v117, 16
    %v153 = vrot.slane %v151, 7
    %v154 = vrot.slane %v153, 4
    %v156 = vshrl.u32 %v118, 16
    %v158 = vrot.slane %v156, 7
    %v159 = vshll.u32 %v118, 16
    %v161 = vor.u32 %v158, %v159
    %v162 = vsel %vm127, %v154, %v161
    %v163 = vrot.slane %v158, 4
    %v165 = vshrl.u32 %v119, 16
    %v167 = vrot.slane %v165, 7
    %v168 = vshll.u32 %v119, 16
    %v170 = vor.u32 %v167, %v168
    %v171 = vsel %vm127, %v163, %v170
    %v173 = vshrl.u32 %v120, 16
    %v175 = vrot.slane %v173, 7
    %v176 = vrot.slane %v175, 4
    %v178 = vshrl.u32 %v121, 16
    %v180 = vrot.slane %v178, 7
    %v181 = vshll.u32 %v121, 16
    %v183 = vor.u32 %v180, %v181
    %v184 = vsel %vm127, %v176, %v183
    %v185 = vrot.slane %v180, 4
    %v187 = vshrl.u32 %v122, 16
    %v189 = vrot.slane %v187, 7
    %v190 = vshll.u32 %v122, 16
    %v192 = vor.u32 %v189, %v190
    %v193 = vsel %vm127, %v185, %v192
    %v195 = vshrl.u32 %v123, 16
    %v197 = vrot.slane %v195, 7
    %v198 = vrot.slane %v197, 4
    %v200 = vshrl.u32 %v124, 16
    %v202 = vrot.slane %v200, 7
    %v203 = vshll.u32 %v124, 16
    %v205 = vor.u32 %v202, %v203
    %v206 = vsel %vm127, %v198, %v205
    %v207 = vrot.slane %v202, 4
    %v209 = vshrl.u32 %v125, 16
    %v211 = vrot.slane %v209, 7
    %v212 = vshll.u32 %v125, 16
    %v214 = vor.u32 %v211, %v212
    %v215 = vsel %vm127, %v207, %v214
    %v216 = vld [vmem:[#allocation3] sm:$0xf]
    %v217 = vld [vmem:[#allocation3 + $0x4] sm:$0xf]
    %v218 = vld [vmem:[#allocation3 + $0x8] sm:$0xf]
    %v219 = vld [vmem:[#allocation3 + $0xc] sm:$0xf]
    %v220 = vld [vmem:[#allocation3 + $0x10] sm:$0xf]
    %v221 = vld [vmem:[#allocation3 + $0x14] sm:$0xf]
    %v222 = vld [vmem:[#allocation3 + $0x18] sm:$0xf]
    %v223 = vld [vmem:[#allocation3 + $0x1c] sm:$0xf]
    %v224 = vld [vmem:[#allocation3 + $0x20] sm:$0xf]
    %v225 = vld [vmem:[#allocation3 + $0x24] sm:$0xf]
    %v226 = vld [vmem:[#allocation3 + $0x28] sm:$0xf]
    %v227 = vld [vmem:[#allocation3 + $0x2c] sm:$0xf]
    %v228 = vld [vmem:[#allocation3 + $0x30] sm:$0xf]
    %v229 = vld [vmem:[#allocation3 + $0x34] sm:$0xf]
    %v230 = vld [vmem:[#allocation3 + $0x38] sm:$0xf]
    %v231 = vld [vmem:[#allocation3 + $0x3c] sm:$0xf]
    %s232 = scalar_lea.vmem [#allocation3], 64
    %v233 = vld [vmem:[%s232] sm:$0xf]
    %v234 = vld [vmem:[%s232 + $0x4] sm:$0xf]
    %v235 = vld [vmem:[%s232 + $0x8] sm:$0xf]
    %v236 = vld [vmem:[%s232 + $0xc] sm:$0xf]
    %v237 = vld [vmem:[%s232 + $0x10] sm:$0xf]
    %v238 = vld [vmem:[%s232 + $0x14] sm:$0xf]
    %v239 = vld [vmem:[%s232 + $0x18] sm:$0xf]
    %v240 = vld [vmem:[%s232 + $0x1c] sm:$0xf]
    %v241 = vld [vmem:[%s232 + $0x20] sm:$0xf]
    %v242 = vld [vmem:[%s232 + $0x24] sm:$0xf]
    %v243 = vld [vmem:[%s232 + $0x28] sm:$0xf]
    %v244 = vld [vmem:[%s232 + $0x2c] sm:$0xf]
    %v245 = vld [vmem:[%s232 + $0x30] sm:$0xf]
    %v246 = vld [vmem:[%s232 + $0x34] sm:$0xf]
    %v247 = vld [vmem:[%s232 + $0x38] sm:$0xf]
    %v248 = vld [vmem:[%s232 + $0x3c] sm:$0xf]
    %v257 = vunpack.c.l.b16 %v115
    %v258 = vunpack.c.l.b16 %v116
    %v259 = vunpack.c.l.b16 %v118
    %v260 = vunpack.c.l.b16 %v119
    %v261 = vunpack.c.l.b16 %v121
    %v262 = vunpack.c.l.b16 %v122
    %v263 = vunpack.c.l.b16 %v124
    %v264 = vunpack.c.l.b16 %v125
    %v265 = vpack.c.b16 %v258, %v257
    %v266 = vpack.c.b16 %v260, %v259
    %v267 = vpack.c.b16 %v262, %v261
    %v268 = vpack.c.b16 %v264, %v263
    %v289 = vunpack.c.l.b16 %v233
    %v290 = vunpack.c.l.b16 %v234
    %v291 = vunpack.c.l.b16 %v235
    %v292 = vunpack.c.l.b16 %v236
    %v293 = vunpack.c.l.b16 %v237
    %v294 = vunpack.c.l.b16 %v238
    %v295 = vunpack.c.l.b16 %v239
    %v296 = vunpack.c.l.b16 %v240
    %v297 = vunpack.c.l.b16 %v241
    %v298 = vunpack.c.l.b16 %v242
    %v299 = vunpack.c.l.b16 %v243
    %v300 = vunpack.c.l.b16 %v244
    %v301 = vunpack.c.l.b16 %v245
    %v302 = vunpack.c.l.b16 %v246
    %v303 = vunpack.c.l.b16 %v247
    %v304 = vunpack.c.l.b16 %v248
    %v305 = vpack.c.b16 %v290, %v289
    %v306 = vpack.c.b16 %v292, %v291
    %v307 = vpack.c.b16 %v294, %v293
    %v308 = vpack.c.b16 %v296, %v295
    %v309 = vpack.c.b16 %v298, %v297
    %v310 = vpack.c.b16 %v300, %v299
    %v311 = vpack.c.b16 %v302, %v301
    %v312 = vpack.c.b16 %v304, %v303
    %321 = vmatpush.bf16.msra.mxu0 %v312
    %322 = vmatpush.bf16.msra.mxu0 %v311
    %323 = vmatpush.bf16.msra.mxu0 %v310
    %324 = vmatpush.bf16.msra.mxu0 %v309
    %325 = vmatpush.bf16.msra.mxu0 %v308
    %326 = vmatpush.bf16.msra.mxu0 %v307
    %327 = vmatpush.bf16.msra.mxu0 %v306
    %328 = vmatpush.bf16.msra.mxu0 %v305
    %329 = vmatmul.bf16.gmra.mxu0 %v265
    %v330 = vpop.f32.mrf.mxu0
    %v331 = vadd.f32 0.0, %v330
    %v332 = vpop.f32.mrf.mxu0
    %v333 = vadd.f32 0.0, %v332
    %334 = vmatmul.bf16.gmra.mxu0 %v266
    %v335 = vpop.f32.mrf.mxu0
    %v336 = vadd.f32 0.0, %v335
    %v337 = vpop.f32.mrf.mxu0
    %v338 = vadd.f32 0.0, %v337
    %339 = vmatmul.bf16.gmra.mxu0 %v267
    %v340 = vpop.f32.mrf.mxu0
    %v341 = vadd.f32 0.0, %v340
    %v342 = vpop.f32.mrf.mxu0
    %v343 = vadd.f32 0.0, %v342
    %344 = vmatmul.bf16.gmra.mxu0 %v268
    %v345 = vpop.f32.mrf.mxu0
    %v346 = vadd.f32 0.0, %v345
    %v347 = vpop.f32.mrf.mxu0
    %v348 = vadd.f32 0.0, %v347
    %349 = vdwg.mxu0
    %v350 = vunpack.c.l.b16 %v140
    %v351 = vunpack.c.l.b16 %v149
    %v352 = vunpack.c.l.b16 %v162
    %v353 = vunpack.c.l.b16 %v171
    %v354 = vunpack.c.l.b16 %v184
    %v355 = vunpack.c.l.b16 %v193
    %v356 = vunpack.c.l.b16 %v206
    %v357 = vunpack.c.l.b16 %v215
    %v358 = vpack.c.b16 %v351, %v350
    %v359 = vpack.c.b16 %v353, %v352
    %v360 = vpack.c.b16 %v355, %v354
    %v361 = vpack.c.b16 %v357, %v356
    %v382 = vunpack.c.l.b16 %v216
    %v383 = vunpack.c.l.b16 %v217
    %v384 = vunpack.c.l.b16 %v218
    %v385 = vunpack.c.l.b16 %v219
    %v386 = vunpack.c.l.b16 %v220
    %v387 = vunpack.c.l.b16 %v221
    %v388 = vunpack.c.l.b16 %v222
    %v389 = vunpack.c.l.b16 %v223
    %v390 = vunpack.c.l.b16 %v224
    %v391 = vunpack.c.l.b16 %v225
    %v392 = vunpack.c.l.b16 %v226
    %v393 = vunpack.c.l.b16 %v227
    %v394 = vunpack.c.l.b16 %v228
    %v395 = vunpack.c.l.b16 %v229
    %v396 = vunpack.c.l.b16 %v230
    %v397 = vunpack.c.l.b16 %v231
    %v398 = vpack.c.b16 %v383, %v382
    %v399 = vpack.c.b16 %v385, %v384
    %v400 = vpack.c.b16 %v387, %v386
    %v401 = vpack.c.b16 %v389, %v388
    %v402 = vpack.c.b16 %v391, %v390
    %v403 = vpack.c.b16 %v393, %v392
    %v404 = vpack.c.b16 %v395, %v394
    %v405 = vpack.c.b16 %v397, %v396
    %414 = vmatpush.bf16.msra.mxu0 %v405
    %415 = vmatpush.bf16.msra.mxu0 %v404
    %416 = vmatpush.bf16.msra.mxu0 %v403
    %417 = vmatpush.bf16.msra.mxu0 %v402
    %418 = vmatpush.bf16.msra.mxu0 %v401
    %419 = vmatpush.bf16.msra.mxu0 %v400
    %420 = vmatpush.bf16.msra.mxu0 %v399
    %421 = vmatpush.bf16.msra.mxu0 %v398
    %422 = vmatmul.bf16.gmra.mxu0 %v358
    %v423 = vpop.f32.mrf.mxu0
    %v424 = vadd.f32 %v331, %v423
    %v425 = vpop.f32.mrf.mxu0
    %v426 = vadd.f32 %v333, %v425
    %427 = vmatmul.bf16.gmra.mxu0 %v359
    %v428 = vpop.f32.mrf.mxu0
    %v429 = vadd.f32 %v336, %v428
    %v430 = vpop.f32.mrf.mxu0
    %v431 = vadd.f32 %v338, %v430
    %432 = vmatmul.bf16.gmra.mxu0 %v360
    %v433 = vpop.f32.mrf.mxu0
    %v434 = vadd.f32 %v341, %v433
    %v435 = vpop.f32.mrf.mxu0
    %v436 = vadd.f32 %v343, %v435
    %437 = vmatmul.bf16.gmra.mxu0 %v361
    %v438 = vpop.f32.mrf.mxu0
    %v439 = vadd.f32 %v346, %v438
    %v440 = vpop.f32.mrf.mxu0
    %v441 = vadd.f32 %v348, %v440
    %442 = vdwg.mxu0
    %v443 = vld [vmem:[#allocation2 + $0x4] sm:$0xf]
    %v444 = vld [vmem:[#allocation2 + $0x8] sm:$0xf]
    %v445 = vld [vmem:[#allocation2 + $0xc] sm:$0x1]
    %v446 = vld [vmem:[#allocation2 + $0x14] sm:$0xf]
    %v447 = vld [vmem:[#allocation2 + $0x18] sm:$0xf]
    %v448 = vld [vmem:[#allocation2 + $0x1c] sm:$0x1]
    %v449 = vld [vmem:[#allocation2 + $0x24] sm:$0xf]
    %v450 = vld [vmem:[#allocation2 + $0x28] sm:$0xf]
    %v451 = vld [vmem:[#allocation2 + $0x2c] sm:$0x1]
    %v452 = vld [vmem:[#allocation2 + $0x34] sm:$0xf]
    %v453 = vld [vmem:[#allocation2 + $0x38] sm:$0xf]
    %v454 = vld [vmem:[#allocation2 + $0x3c] sm:$0x1]
    %vm455 = vsmask.f32 3328
    %vm456 = vsmask.f32 7440
    %vm457 = vmor %vm455, %vm456
    %v459 = vshrl.u32 %v443, 16
    %v461 = vrot.slane %v459, 4
    %v462 = vshll.u32 %v443, 16
    %v464 = vrot.slane %v462, 5
    %v465 = vor.u32 %v461, %v464
    %v466 = vrot.slane %v465, 4
    %v468 = vshll.u32 %v444, 16
    %v470 = vrot.slane %v468, 5
    %v471 = vsel %vm457, %v466, %v470
    %v472 = vshrl.u32 %v444, 16
    %v474 = vrot.slane %v472, 4
    %v475 = vor.u32 %v474, %v470
    %v476 = vrot.slane %v475, 4
    %v478 = vshll.u32 %v445, 16
    %v480 = vrot.slane %v478, 5
    %v481 = vsel %vm457, %v476, %v480
    %v483 = vshrl.u32 %v446, 16
    %v485 = vrot.slane %v483, 4
    %v486 = vshll.u32 %v446, 16
    %v488 = vrot.slane %v486, 5
    %v489 = vor.u32 %v485, %v488
    %v490 = vrot.slane %v489, 4
    %v492 = vshll.u32 %v447, 16
    %v494 = vrot.slane %v492, 5
    %v495 = vsel %vm457, %v490, %v494
    %v496 = vshrl.u32 %v447, 16
    %v498 = vrot.slane %v496, 4
    %v499 = vor.u32 %v498, %v494
    %v500 = vrot.slane %v499, 4
    %v502 = vshll.u32 %v448, 16
    %v504 = vrot.slane %v502, 5
    %v505 = vsel %vm457, %v500, %v504
    %v507 = vshrl.u32 %v449, 16
    %v509 = vrot.slane %v507, 4
    %v510 = vshll.u32 %v449, 16
    %v512 = vrot.slane %v510, 5
    %v513 = vor.u32 %v509, %v512
    %v514 = vrot.slane %v513, 4
    %v516 = vshll.u32 %v450, 16
    %v518 = vrot.slane %v516, 5
    %v519 = vsel %vm457, %v514, %v518
    %v520 = vshrl.u32 %v450, 16
    %v522 = vrot.slane %v520, 4
    %v523 = vor.u32 %v522, %v518
    %v524 = vrot.slane %v523, 4
    %v526 = vshll.u32 %v451, 16
    %v528 = vrot.slane %v526, 5
    %v529 = vsel %vm457, %v524, %v528
    %v531 = vshrl.u32 %v452, 16
    %v533 = vrot.slane %v531, 4
    %v534 = vshll.u32 %v452, 16
    %v536 = vrot.slane %v534, 5
    %v537 = vor.u32 %v533, %v536
    %v538 = vrot.slane %v537, 4
    %v540 = vshll.u32 %v453, 16
    %v542 = vrot.slane %v540, 5
    %v543 = vsel %vm457, %v538, %v542
    %v544 = vshrl.u32 %v453, 16
    %v546 = vrot.slane %v544, 4
    %v547 = vor.u32 %v546, %v542
    %v548 = vrot.slane %v547, 4
    %v550 = vshll.u32 %v454, 16
    %v552 = vrot.slane %v550, 5
    %v553 = vsel %vm457, %v548, %v552
    %s554 = scalar_lea.vmem [#allocation3], 128
    %v555 = vld [vmem:[%s554] sm:$0xf]
    %v556 = vld [vmem:[%s554 + $0x4] sm:$0xf]
    %v557 = vld [vmem:[%s554 + $0x8] sm:$0xf]
    %v558 = vld [vmem:[%s554 + $0xc] sm:$0xf]
    %v559 = vld [vmem:[%s554 + $0x10] sm:$0xf]
    %v560 = vld [vmem:[%s554 + $0x14] sm:$0xf]
    %v561 = vld [vmem:[%s554 + $0x18] sm:$0xf]
    %v562 = vld [vmem:[%s554 + $0x1c] sm:$0xf]
    %v563 = vld [vmem:[%s554 + $0x20] sm:$0xf]
    %v564 = vld [vmem:[%s554 + $0x24] sm:$0xf]
    %v565 = vld [vmem:[%s554 + $0x28] sm:$0xf]
    %v566 = vld [vmem:[%s554 + $0x2c] sm:$0xf]
    %v567 = vld [vmem:[%s554 + $0x30] sm:$0xf]
    %v568 = vld [vmem:[%s554 + $0x34] sm:$0xf]
    %v569 = vld [vmem:[%s554 + $0x38] sm:$0xf]
    %v570 = vld [vmem:[%s554 + $0x3c] sm:$0xf]
    %v571 = vunpack.c.l.b16 %v471
    %v572 = vunpack.c.l.b16 %v481
    %v573 = vunpack.c.l.b16 %v495
    %v574 = vunpack.c.l.b16 %v505
    %v575 = vunpack.c.l.b16 %v519
    %v576 = vunpack.c.l.b16 %v529
    %v577 = vunpack.c.l.b16 %v543
    %v578 = vunpack.c.l.b16 %v553
    %v579 = vpack.c.b16 %v572, %v571
    %v580 = vpack.c.b16 %v574, %v573
    %v581 = vpack.c.b16 %v576, %v575
    %v582 = vpack.c.b16 %v578, %v577
    %v603 = vunpack.c.l.b16 %v555
    %v604 = vunpack.c.l.b16 %v556
    %v605 = vunpack.c.l.b16 %v557
    %v606 = vunpack.c.l.b16 %v558
    %v607 = vunpack.c.l.b16 %v559
    %v608 = vunpack.c.l.b16 %v560
    %v609 = vunpack.c.l.b16 %v561
    %v610 = vunpack.c.l.b16 %v562
    %v611 = vunpack.c.l.b16 %v563
    %v612 = vunpack.c.l.b16 %v564
    %v613 = vunpack.c.l.b16 %v565
    %v614 = vunpack.c.l.b16 %v566
    %v615 = vunpack.c.l.b16 %v567
    %v616 = vunpack.c.l.b16 %v568
    %v617 = vunpack.c.l.b16 %v569
    %v618 = vunpack.c.l.b16 %v570
    %v619 = vpack.c.b16 %v604, %v603
    %v620 = vpack.c.b16 %v606, %v605
    %v621 = vpack.c.b16 %v608, %v607
    %v622 = vpack.c.b16 %v610, %v609
    %v623 = vpack.c.b16 %v612, %v611
    %v624 = vpack.c.b16 %v614, %v613
    %v625 = vpack.c.b16 %v616, %v615
    %v626 = vpack.c.b16 %v618, %v617
    %635 = vmatpush.bf16.msra.mxu0 %v626
    %636 = vmatpush.bf16.msra.mxu0 %v625
    %637 = vmatpush.bf16.msra.mxu0 %v624
    %638 = vmatpush.bf16.msra.mxu0 %v623
    %639 = vmatpush.bf16.msra.mxu0 %v622
    %640 = vmatpush.bf16.msra.mxu0 %v621
    %641 = vmatpush.bf16.msra.mxu0 %v620
    %642 = vmatpush.bf16.msra.mxu0 %v619
    %643 = vmatmul.bf16.gmra.mxu0 %v579
    %v644 = vpop.f32.mrf.mxu0
    %v645 = vadd.f32 0.0, %v644
    %v646 = vpop.f32.mrf.mxu0
    %v647 = vadd.f32 0.0, %v646
    %648 = vmatmul.bf16.gmra.mxu0 %v580
    %v649 = vpop.f32.mrf.mxu0
    %v650 = vadd.f32 0.0, %v649
    %v651 = vpop.f32.mrf.mxu0
    %v652 = vadd.f32 0.0, %v651
    %653 = vmatmul.bf16.gmra.mxu0 %v581
    %v654 = vpop.f32.mrf.mxu0
    %v655 = vadd.f32 0.0, %v654
    %v656 = vpop.f32.mrf.mxu0
    %v657 = vadd.f32 0.0, %v656
    %658 = vmatmul.bf16.gmra.mxu0 %v582
    %v659 = vpop.f32.mrf.mxu0
    %v660 = vadd.f32 0.0, %v659
    %v661 = vpop.f32.mrf.mxu0
    %v662 = vadd.f32 0.0, %v661
    %663 = vdwg.mxu0
    %v664 = vadd.f32 %v424, %v645
    %v665 = vadd.f32 %v426, %v647
    %v666 = vadd.f32 %v429, %v650
    %v667 = vadd.f32 %v431, %v652
    %v668 = vadd.f32 %v434, %v655
    %v669 = vadd.f32 %v436, %v657
    %v670 = vadd.f32 %v439, %v660
    %v671 = vadd.f32 %v441, %v662
    %v672 = vld [vmem:[%s2] sm:$0x1]
    %v674 = vperm.slane %v672, 0
    %v676 = vadd.f32 %v664, %v674
    %v677 = vadd.f32 %v665, %v674
    %v678 = vadd.f32 %v666, %v674
    %v679 = vadd.f32 %v667, %v674
    %v680 = vadd.f32 %v668, %v674
    %v681 = vadd.f32 %v669, %v674
    %v682 = vadd.f32 %v670, %v674
    %v683 = vadd.f32 %v671, %v674
    %v684 = vmax.f32 %v676, 0.0
    %v685 = vmax.f32 %v677, 0.0
    %v686 = vmax.f32 %v678, 0.0
    %v687 = vmax.f32 %v679, 0.0
    %v688 = vmax.f32 %v680, 0.0
    %v689 = vmax.f32 %v681, 0.0
    %v690 = vmax.f32 %v682, 0.0
    %v691 = vmax.f32 %v683, 0.0
    %v692 = vpack.c.bf16 %v684, %v684
    %v693 = vpack.c.bf16 %v685, %v685
    %v694 = vpack.c.bf16 %v686, %v686
    %v695 = vpack.c.bf16 %v687, %v687
    %v696 = vpack.c.bf16 %v688, %v688
    %v697 = vpack.c.bf16 %v689, %v689
    %v698 = vpack.c.bf16 %v690, %v690
    %v699 = vpack.c.bf16 %v691, %v691
    %700 = vst [vmem:[#allocation2 + $0x4] sm:$0xf] %v692
    %701 = vst [vmem:[#allocation2 + $0x8] sm:$0xf] %v693
    %702 = vst [vmem:[#allocation2 + $0x14] sm:$0xf] %v694
    %703 = vst [vmem:[#allocation2 + $0x18] sm:$0xf] %v695
    %704 = vst [vmem:[#allocation2 + $0x24] sm:$0xf] %v696
    %705 = vst [vmem:[#allocation2 + $0x28] sm:$0xf] %v697
    %706 = vst [vmem:[#allocation2 + $0x34] sm:$0xf] %v698
    %707 = vst [vmem:[#allocation2 + $0x38] sm:$0xf] %v699
    %v708 = vld [vmem:[#allocation2] sm:$0x8]
    %v709 = vld [vmem:[#allocation2 + $0x4] sm:$0xf]
    %v710 = vld [vmem:[#allocation2 + $0x8] sm:$0xf]
    %v711 = vld [vmem:[#allocation2 + $0x10] sm:$0x8]
    %v712 = vld [vmem:[#allocation2 + $0x14] sm:$0xf]
    %v713 = vld [vmem:[#allocation2 + $0x18] sm:$0xf]
    %v714 = vld [vmem:[#allocation2 + $0x20] sm:$0x8]
    %v715 = vld [vmem:[#allocation2 + $0x24] sm:$0xf]
    %v716 = vld [vmem:[#allocation2 + $0x28] sm:$0xf]
    %v717 = vld [vmem:[#allocation2 + $0x30] sm:$0x8]
    %v718 = vld [vmem:[#allocation2 + $0x34] sm:$0xf]
    %v719 = vld [vmem:[#allocation2 + $0x38] sm:$0xf]
    %v721 = vshrl.u32 %v708, 16
    %v723 = vrot.slane %v721, 7
    %v724 = vrot.slane %v723, 4
    %v726 = vshrl.u32 %v709, 16
    %v728 = vrot.slane %v726, 7
    %v729 = vshll.u32 %v709, 16
    %v731 = vor.u32 %v728, %v729
    %v732 = vsel %vm127, %v724, %v731
    %v733 = vrot.slane %v728, 4
    %v735 = vshrl.u32 %v710, 16
    %v737 = vrot.slane %v735, 7
    %v738 = vshll.u32 %v710, 16
    %v740 = vor.u32 %v737, %v738
    %v741 = vsel %vm127, %v733, %v740
    %v743 = vshrl.u32 %v711, 16
    %v745 = vrot.slane %v743, 7
    %v746 = vrot.slane %v745, 4
    %v748 = vshrl.u32 %v712, 16
    %v750 = vrot.slane %v748, 7
    %v751 = vshll.u32 %v712, 16
    %v753 = vor.u32 %v750, %v751
    %v754 = vsel %vm127, %v746, %v753
    %v755 = vrot.slane %v750, 4
    %v757 = vshrl.u32 %v713, 16
    %v759 = vrot.slane %v757, 7
    %v760 = vshll.u32 %v713, 16
    %v762 = vor.u32 %v759, %v760
    %v763 = vsel %vm127, %v755, %v762
    %v765 = vshrl.u32 %v714, 16
    %v767 = vrot.slane %v765, 7
    %v768 = vrot.slane %v767, 4
    %v770 = vshrl.u32 %v715, 16
    %v772 = vrot.slane %v770, 7
    %v773 = vshll.u32 %v715, 16
    %v775 = vor.u32 %v772, %v773
    %v776 = vsel %vm127, %v768, %v775
    %v777 = vrot.slane %v772, 4
    %v779 = vshrl.u32 %v716, 16
    %v781 = vrot.slane %v779, 7
    %v782 = vshll.u32 %v716, 16
    %v784 = vor.u32 %v781, %v782
    %v785 = vsel %vm127, %v777, %v784
    %v787 = vshrl.u32 %v717, 16
    %v789 = vrot.slane %v787, 7
    %v790 = vrot.slane %v789, 4
    %v792 = vshrl.u32 %v718, 16
    %v794 = vrot.slane %v792, 7
    %v795 = vshll.u32 %v718, 16
    %v797 = vor.u32 %v794, %v795
    %v798 = vsel %vm127, %v790, %v797
    %v799 = vrot.slane %v794, 4
    %v801 = vshrl.u32 %v719, 16
    %v803 = vrot.slane %v801, 7
    %v804 = vshll.u32 %v719, 16
    %v806 = vor.u32 %v803, %v804
    %v807 = vsel %vm127, %v799, %v806
    %v808 = vld [vmem:[#allocation5] sm:$0xf]
    %v809 = vld [vmem:[#allocation5 + $0x4] sm:$0xf]
    %v810 = vld [vmem:[#allocation5 + $0x8] sm:$0xf]
    %v811 = vld [vmem:[#allocation5 + $0xc] sm:$0xf]
    %v812 = vld [vmem:[#allocation5 + $0x10] sm:$0xf]
    %v813 = vld [vmem:[#allocation5 + $0x14] sm:$0xf]
    %v814 = vld [vmem:[#allocation5 + $0x18] sm:$0xf]
    %v815 = vld [vmem:[#allocation5 + $0x1c] sm:$0xf]
    %v816 = vld [vmem:[#allocation5 + $0x20] sm:$0xf]
    %v817 = vld [vmem:[#allocation5 + $0x24] sm:$0xf]
    %v818 = vld [vmem:[#allocation5 + $0x28] sm:$0xf]
    %v819 = vld [vmem:[#allocation5 + $0x2c] sm:$0xf]
    %v820 = vld [vmem:[#allocation5 + $0x30] sm:$0xf]
    %v821 = vld [vmem:[#allocation5 + $0x34] sm:$0xf]
    %v822 = vld [vmem:[#allocation5 + $0x38] sm:$0xf]
    %v823 = vld [vmem:[#allocation5 + $0x3c] sm:$0xf]
    %s824 = scalar_lea.vmem [#allocation5], 64
    %v825 = vld [vmem:[%s824] sm:$0xf]
    %v826 = vld [vmem:[%s824 + $0x4] sm:$0xf]
    %v827 = vld [vmem:[%s824 + $0x8] sm:$0xf]
    %v828 = vld [vmem:[%s824 + $0xc] sm:$0xf]
    %v829 = vld [vmem:[%s824 + $0x10] sm:$0xf]
    %v830 = vld [vmem:[%s824 + $0x14] sm:$0xf]
    %v831 = vld [vmem:[%s824 + $0x18] sm:$0xf]
    %v832 = vld [vmem:[%s824 + $0x1c] sm:$0xf]
    %v833 = vld [vmem:[%s824 + $0x20] sm:$0xf]
    %v834 = vld [vmem:[%s824 + $0x24] sm:$0xf]
    %v835 = vld [vmem:[%s824 + $0x28] sm:$0xf]
    %v836 = vld [vmem:[%s824 + $0x2c] sm:$0xf]
    %v837 = vld [vmem:[%s824 + $0x30] sm:$0xf]
    %v838 = vld [vmem:[%s824 + $0x34] sm:$0xf]
    %v839 = vld [vmem:[%s824 + $0x38] sm:$0xf]
    %v840 = vld [vmem:[%s824 + $0x3c] sm:$0xf]
    %v849 = vunpack.c.l.b16 %v709
    %v850 = vunpack.c.l.b16 %v710
    %v851 = vunpack.c.l.b16 %v712
    %v852 = vunpack.c.l.b16 %v713
    %v853 = vunpack.c.l.b16 %v715
    %v854 = vunpack.c.l.b16 %v716
    %v855 = vunpack.c.l.b16 %v718
    %v856 = vunpack.c.l.b16 %v719
    %v857 = vpack.c.b16 %v850, %v849
    %v858 = vpack.c.b16 %v852, %v851
    %v859 = vpack.c.b16 %v854, %v853
    %v860 = vpack.c.b16 %v856, %v855
    %v881 = vunpack.c.l.b16 %v825
    %v882 = vunpack.c.l.b16 %v826
    %v883 = vunpack.c.l.b16 %v827
    %v884 = vunpack.c.l.b16 %v828
    %v885 = vunpack.c.l.b16 %v829
    %v886 = vunpack.c.l.b16 %v830
    %v887 = vunpack.c.l.b16 %v831
    %v888 = vunpack.c.l.b16 %v832
    %v889 = vunpack.c.l.b16 %v833
    %v890 = vunpack.c.l.b16 %v834
    %v891 = vunpack.c.l.b16 %v835
    %v892 = vunpack.c.l.b16 %v836
    %v893 = vunpack.c.l.b16 %v837
    %v894 = vunpack.c.l.b16 %v838
    %v895 = vunpack.c.l.b16 %v839
    %v896 = vunpack.c.l.b16 %v840
    %v897 = vpack.c.b16 %v882, %v881
    %v898 = vpack.c.b16 %v884, %v883
    %v899 = vpack.c.b16 %v886, %v885
    %v900 = vpack.c.b16 %v888, %v887
    %v901 = vpack.c.b16 %v890, %v889
    %v902 = vpack.c.b16 %v892, %v891
    %v903 = vpack.c.b16 %v894, %v893
    %v904 = vpack.c.b16 %v896, %v895
    %913 = vmatpush.bf16.msra.mxu0 %v904
    %914 = vmatpush.bf16.msra.mxu0 %v903
    %915 = vmatpush.bf16.msra.mxu0 %v902
    %916 = vmatpush.bf16.msra.mxu0 %v901
    %917 = vmatpush.bf16.msra.mxu0 %v900
    %918 = vmatpush.bf16.msra.mxu0 %v899
    %919 = vmatpush.bf16.msra.mxu0 %v898
    %920 = vmatpush.bf16.msra.mxu0 %v897
    %921 = vmatmul.bf16.gmra.mxu0 %v857
    %v922 = vpop.f32.mrf.mxu0
    %v923 = vadd.f32 0.0, %v922
    %v924 = vpop.f32.mrf.mxu0
    %v925 = vadd.f32 0.0, %v924
    %926 = vmatmul.bf16.gmra.mxu0 %v858
    %v927 = vpop.f32.mrf.mxu0
    %v928 = vadd.f32 0.0, %v927
    %v929 = vpop.f32.mrf.mxu0
    %v930 = vadd.f32 0.0, %v929
    %931 = vmatmul.bf16.gmra.mxu0 %v859
    %v932 = vpop.f32.mrf.mxu0
    %v933 = vadd.f32 0.0, %v932
    %v934 = vpop.f32.mrf.mxu0
    %v935 = vadd.f32 0.0, %v934
    %936 = vmatmul.bf16.gmra.mxu0 %v860
    %v937 = vpop.f32.mrf.mxu0
    %v938 = vadd.f32 0.0, %v937
    %v939 = vpop.f32.mrf.mxu0
    %v940 = vadd.f32 0.0, %v939
    %941 = vdwg.mxu0
    %v942 = vunpack.c.l.b16 %v732
    %v943 = vunpack.c.l.b16 %v741
    %v944 = vunpack.c.l.b16 %v754
    %v945 = vunpack.c.l.b16 %v763
    %v946 = vunpack.c.l.b16 %v776
    %v947 = vunpack.c.l.b16 %v785
    %v948 = vunpack.c.l.b16 %v798
    %v949 = vunpack.c.l.b16 %v807
    %v950 = vpack.c.b16 %v943, %v942
    %v951 = vpack.c.b16 %v945, %v944
    %v952 = vpack.c.b16 %v947, %v946
    %v953 = vpack.c.b16 %v949, %v948
    %v974 = vunpack.c.l.b16 %v808
    %v975 = vunpack.c.l.b16 %v809
    %v976 = vunpack.c.l.b16 %v810
    %v977 = vunpack.c.l.b16 %v811
    %v978 = vunpack.c.l.b16 %v812
    %v979 = vunpack.c.l.b16 %v813
    %v980 = vunpack.c.l.b16 %v814
    %v981 = vunpack.c.l.b16 %v815
    %v982 = vunpack.c.l.b16 %v816
    %v983 = vunpack.c.l.b16 %v817
    %v984 = vunpack.c.l.b16 %v818
    %v985 = vunpack.c.l.b16 %v819
    %v986 = vunpack.c.l.b16 %v820
    %v987 = vunpack.c.l.b16 %v821
    %v988 = vunpack.c.l.b16 %v822
    %v989 = vunpack.c.l.b16 %v823
    %v990 = vpack.c.b16 %v975, %v974
    %v991 = vpack.c.b16 %v977, %v976
    %v992 = vpack.c.b16 %v979, %v978
    %v993 = vpack.c.b16 %v981, %v980
    %v994 = vpack.c.b16 %v983, %v982
    %v995 = vpack.c.b16 %v985, %v984
    %v996 = vpack.c.b16 %v987, %v986
    %v997 = vpack.c.b16 %v989, %v988
    %1006 = vmatpush.bf16.msra.mxu0 %v997
    %1007 = vmatpush.bf16.msra.mxu0 %v996
    %1008 = vmatpush.bf16.msra.mxu0 %v995
    %1009 = vmatpush.bf16.msra.mxu0 %v994
    %1010 = vmatpush.bf16.msra.mxu0 %v993
    %1011 = vmatpush.bf16.msra.mxu0 %v992
    %1012 = vmatpush.bf16.msra.mxu0 %v991
    %1013 = vmatpush.bf16.msra.mxu0 %v990
    %1014 = vmatmul.bf16.gmra.mxu0 %v950
    %v1015 = vpop.f32.mrf.mxu0
    %v1016 = vadd.f32 %v923, %v1015
    %v1017 = vpop.f32.mrf.mxu0
    %v1018 = vadd.f32 %v925, %v1017
    %1019 = vmatmul.bf16.gmra.mxu0 %v951
    %v1020 = vpop.f32.mrf.mxu0
    %v1021 = vadd.f32 %v928, %v1020
    %v1022 = vpop.f32.mrf.mxu0
    %v1023 = vadd.f32 %v930, %v1022
    %1024 = vmatmul.bf16.gmra.mxu0 %v952
    %v1025 = vpop.f32.mrf.mxu0
    %v1026 = vadd.f32 %v933, %v1025
    %v1027 = vpop.f32.mrf.mxu0
    %v1028 = vadd.f32 %v935, %v1027
    %1029 = vmatmul.bf16.gmra.mxu0 %v953
    %v1030 = vpop.f32.mrf.mxu0
    %v1031 = vadd.f32 %v938, %v1030
    %v1032 = vpop.f32.mrf.mxu0
    %v1033 = vadd.f32 %v940, %v1032
    %1034 = vdwg.mxu0
    %v1035 = vld [vmem:[#allocation2 + $0x4] sm:$0xf]
    %v1036 = vld [vmem:[#allocation2 + $0x8] sm:$0xf]
    %v1037 = vld [vmem:[#allocation2 + $0xc] sm:$0x1]
    %v1038 = vld [vmem:[#allocation2 + $0x14] sm:$0xf]
    %v1039 = vld [vmem:[#allocation2 + $0x18] sm:$0xf]
    %v1040 = vld [vmem:[#allocation2 + $0x1c] sm:$0x1]
    %v1041 = vld [vmem:[#allocation2 + $0x24] sm:$0xf]
    %v1042 = vld [vmem:[#allocation2 + $0x28] sm:$0xf]
    %v1043 = vld [vmem:[#allocation2 + $0x2c] sm:$0x1]
    %v1044 = vld [vmem:[#allocation2 + $0x34] sm:$0xf]
    %v1045 = vld [vmem:[#allocation2 + $0x38] sm:$0xf]
    %v1046 = vld [vmem:[#allocation2 + $0x3c] sm:$0x1]
    %v1048 = vshrl.u32 %v1035, 16
    %v1050 = vrot.slane %v1048, 4
    %v1051 = vshll.u32 %v1035, 16
    %v1053 = vrot.slane %v1051, 5
    %v1054 = vor.u32 %v1050, %v1053
    %v1055 = vrot.slane %v1054, 4
    %v1057 = vshll.u32 %v1036, 16
    %v1059 = vrot.slane %v1057, 5
    %v1060 = vsel %vm457, %v1055, %v1059
    %v1061 = vshrl.u32 %v1036, 16
    %v1063 = vrot.slane %v1061, 4
    %v1064 = vor.u32 %v1063, %v1059
    %v1065 = vrot.slane %v1064, 4
    %v1067 = vshll.u32 %v1037, 16
    %v1069 = vrot.slane %v1067, 5
    %v1070 = vsel %vm457, %v1065, %v1069
    %v1072 = vshrl.u32 %v1038, 16
    %v1074 = vrot.slane %v1072, 4
    %v1075 = vshll.u32 %v1038, 16
    %v1077 = vrot.slane %v1075, 5
    %v1078 = vor.u32 %v1074, %v1077
    %v1079 = vrot.slane %v1078, 4
    %v1081 = vshll.u32 %v1039, 16
    %v1083 = vrot.slane %v1081, 5
    %v1084 = vsel %vm457, %v1079, %v1083
    %v1085 = vshrl.u32 %v1039, 16
    %v1087 = vrot.slane %v1085, 4
    %v1088 = vor.u32 %v1087, %v1083
    %v1089 = vrot.slane %v1088, 4
    %v1091 = vshll.u32 %v1040, 16
    %v1093 = vrot.slane %v1091, 5
    %v1094 = vsel %vm457, %v1089, %v1093
    %v1096 = vshrl.u32 %v1041, 16
    %v1098 = vrot.slane %v1096, 4
    %v1099 = vshll.u32 %v1041, 16
    %v1101 = vrot.slane %v1099, 5
    %v1102 = vor.u32 %v1098, %v1101
    %v1103 = vrot.slane %v1102, 4
    %v1105 = vshll.u32 %v1042, 16
    %v1107 = vrot.slane %v1105, 5
    %v1108 = vsel %vm457, %v1103, %v1107
    %v1109 = vshrl.u32 %v1042, 16
    %v1111 = vrot.slane %v1109, 4
    %v1112 = vor.u32 %v1111, %v1107
    %v1113 = vrot.slane %v1112, 4
    %v1115 = vshll.u32 %v1043, 16
    %v1117 = vrot.slane %v1115, 5
    %v1118 = vsel %vm457, %v1113, %v1117
    %v1120 = vshrl.u32 %v1044, 16
    %v1122 = vrot.slane %v1120, 4
    %v1123 = vshll.u32 %v1044, 16
    %v1125 = vrot.slane %v1123, 5
    %v1126 = vor.u32 %v1122, %v1125
    %v1127 = vrot.slane %v1126, 4
    %v1129 = vshll.u32 %v1045, 16
    %v1131 = vrot.slane %v1129, 5
    %v1132 = vsel %vm457, %v1127, %v1131
    %v1133 = vshrl.u32 %v1045, 16
    %v1135 = vrot.slane %v1133, 4
    %v1136 = vor.u32 %v1135, %v1131
    %v1137 = vrot.slane %v1136, 4
    %v1139 = vshll.u32 %v1046, 16
    %v1141 = vrot.slane %v1139, 5
    %v1142 = vsel %vm457, %v1137, %v1141
    %s1143 = scalar_lea.vmem [#allocation5], 128
    %v1144 = vld [vmem:[%s1143] sm:$0xf]
    %v1145 = vld [vmem:[%s1143 + $0x4] sm:$0xf]
    %v1146 = vld [vmem:[%s1143 + $0x8] sm:$0xf]
    %v1147 = vld [vmem:[%s1143 + $0xc] sm:$0xf]
    %v1148 = vld [vmem:[%s1143 + $0x10] sm:$0xf]
    %v1149 = vld [vmem:[%s1143 + $0x14] sm:$0xf]
    %v1150 = vld [vmem:[%s1143 + $0x18] sm:$0xf]
    %v1151 = vld [vmem:[%s1143 + $0x1c] sm:$0xf]
    %v1152 = vld [vmem:[%s1143 + $0x20] sm:$0xf]
    %v1153 = vld [vmem:[%s1143 + $0x24] sm:$0xf]
    %v1154 = vld [vmem:[%s1143 + $0x28] sm:$0xf]
    %v1155 = vld [vmem:[%s1143 + $0x2c] sm:$0xf]
    %v1156 = vld [vmem:[%s1143 + $0x30] sm:$0xf]
    %v1157 = vld [vmem:[%s1143 + $0x34] sm:$0xf]
    %v1158 = vld [vmem:[%s1143 + $0x38] sm:$0xf]
    %v1159 = vld [vmem:[%s1143 + $0x3c] sm:$0xf]
    %v1160 = vunpack.c.l.b16 %v1060
    %v1161 = vunpack.c.l.b16 %v1070
    %v1162 = vunpack.c.l.b16 %v1084
    %v1163 = vunpack.c.l.b16 %v1094
    %v1164 = vunpack.c.l.b16 %v1108
    %v1165 = vunpack.c.l.b16 %v1118
    %v1166 = vunpack.c.l.b16 %v1132
    %v1167 = vunpack.c.l.b16 %v1142
    %v1168 = vpack.c.b16 %v1161, %v1160
    %v1169 = vpack.c.b16 %v1163, %v1162
    %v1170 = vpack.c.b16 %v1165, %v1164
    %v1171 = vpack.c.b16 %v1167, %v1166
    %v1192 = vunpack.c.l.b16 %v1144
    %v1193 = vunpack.c.l.b16 %v1145
    %v1194 = vunpack.c.l.b16 %v1146
    %v1195 = vunpack.c.l.b16 %v1147
    %v1196 = vunpack.c.l.b16 %v1148
    %v1197 = vunpack.c.l.b16 %v1149
    %v1198 = vunpack.c.l.b16 %v1150
    %v1199 = vunpack.c.l.b16 %v1151
    %v1200 = vunpack.c.l.b16 %v1152
    %v1201 = vunpack.c.l.b16 %v1153
    %v1202 = vunpack.c.l.b16 %v1154
    %v1203 = vunpack.c.l.b16 %v1155
    %v1204 = vunpack.c.l.b16 %v1156
    %v1205 = vunpack.c.l.b16 %v1157
    %v1206 = vunpack.c.l.b16 %v1158
    %v1207 = vunpack.c.l.b16 %v1159
    %v1208 = vpack.c.b16 %v1193, %v1192
    %v1209 = vpack.c.b16 %v1195, %v1194
    %v1210 = vpack.c.b16 %v1197, %v1196
    %v1211 = vpack.c.b16 %v1199, %v1198
    %v1212 = vpack.c.b16 %v1201, %v1200
    %v1213 = vpack.c.b16 %v1203, %v1202
    %v1214 = vpack.c.b16 %v1205, %v1204
    %v1215 = vpack.c.b16 %v1207, %v1206
    %1224 = vmatpush.bf16.msra.mxu0 %v1215
    %1225 = vmatpush.bf16.msra.mxu0 %v1214
    %1226 = vmatpush.bf16.msra.mxu0 %v1213
    %1227 = vmatpush.bf16.msra.mxu0 %v1212
    %1228 = vmatpush.bf16.msra.mxu0 %v1211
    %1229 = vmatpush.bf16.msra.mxu0 %v1210
    %1230 = vmatpush.bf16.msra.mxu0 %v1209
    %1231 = vmatpush.bf16.msra.mxu0 %v1208
    %1232 = vmatmul.bf16.gmra.mxu0 %v1168
    %v1233 = vpop.f32.mrf.mxu0
    %v1234 = vadd.f32 0.0, %v1233
    %v1235 = vpop.f32.mrf.mxu0
    %v1236 = vadd.f32 0.0, %v1235
    %1237 = vmatmul.bf16.gmra.mxu0 %v1169
    %v1238 = vpop.f32.mrf.mxu0
    %v1239 = vadd.f32 0.0, %v1238
    %v1240 = vpop.f32.mrf.mxu0
    %v1241 = vadd.f32 0.0, %v1240
    %1242 = vmatmul.bf16.gmra.mxu0 %v1170
    %v1243 = vpop.f32.mrf.mxu0
    %v1244 = vadd.f32 0.0, %v1243
    %v1245 = vpop.f32.mrf.mxu0
    %v1246 = vadd.f32 0.0, %v1245
    %1247 = vmatmul.bf16.gmra.mxu0 %v1171
    %v1248 = vpop.f32.mrf.mxu0
    %v1249 = vadd.f32 0.0, %v1248
    %v1250 = vpop.f32.mrf.mxu0
    %v1251 = vadd.f32 0.0, %v1250
    %1252 = vdwg.mxu0
    %v1253 = vadd.f32 %v1016, %v1234
    %v1254 = vadd.f32 %v1018, %v1236
    %v1255 = vadd.f32 %v1021, %v1239
    %v1256 = vadd.f32 %v1023, %v1241
    %v1257 = vadd.f32 %v1026, %v1244
    %v1258 = vadd.f32 %v1028, %v1246
    %v1259 = vadd.f32 %v1031, %v1249
    %v1260 = vadd.f32 %v1033, %v1251
    %v1261 = vld [vmem:[%s4] sm:$0x1]
    %v1263 = vperm.slane %v1261, 0
    %v1265 = vadd.f32 %v1253, %v1263
    %v1266 = vadd.f32 %v1254, %v1263
    %v1267 = vadd.f32 %v1255, %v1263
    %v1268 = vadd.f32 %v1256, %v1263
    %v1269 = vadd.f32 %v1257, %v1263
    %v1270 = vadd.f32 %v1258, %v1263
    %v1271 = vadd.f32 %v1259, %v1263
    %v1272 = vadd.f32 %v1260, %v1263
    %v1273 = vmax.f32 %v1265, 0.0
    %v1274 = vmax.f32 %v1266, 0.0
    %v1275 = vmax.f32 %v1267, 0.0
    %v1276 = vmax.f32 %v1268, 0.0
    %v1277 = vmax.f32 %v1269, 0.0
    %v1278 = vmax.f32 %v1270, 0.0
    %v1279 = vmax.f32 %v1271, 0.0
    %v1280 = vmax.f32 %v1272, 0.0
    %v1281 = vpack.c.bf16 %v1274, %v1273
    %v1282 = vpack.c.bf16 %v1276, %v1275
    %v1283 = vpack.c.bf16 %v1278, %v1277
    %v1284 = vpack.c.bf16 %v1280, %v1279
    %v1285 = vld [vmem:[%s5] sm:$0xf]
    %v1286 = vld [vmem:[%s5 + $0x4] sm:$0xf]
    %v1287 = vld [vmem:[%s5 + $0x8] sm:$0xf]
    %v1288 = vld [vmem:[%s5 + $0xc] sm:$0xf]
    %v1289 = vld [vmem:[%s5 + $0x10] sm:$0xf]
    %v1290 = vld [vmem:[%s5 + $0x14] sm:$0xf]
    %v1291 = vld [vmem:[%s5 + $0x18] sm:$0xf]
    %v1292 = vld [vmem:[%s5 + $0x1c] sm:$0xf]
    %v1293 = vld [vmem:[%s5 + $0x20] sm:$0xf]
    %v1294 = vld [vmem:[%s5 + $0x24] sm:$0xf]
    %v1295 = vld [vmem:[%s5 + $0x28] sm:$0xf]
    %v1296 = vld [vmem:[%s5 + $0x2c] sm:$0xf]
    %v1297 = vld [vmem:[%s5 + $0x30] sm:$0xf]
    %v1298 = vld [vmem:[%s5 + $0x34] sm:$0xf]
    %v1299 = vld [vmem:[%s5 + $0x38] sm:$0xf]
    %v1300 = vld [vmem:[%s5 + $0x3c] sm:$0xf]
    %v1301 = vld [vmem:[%s6] sm:$0x1]
    %v1303 = vperm.slane %v1301, 0
    %v1321 = vunpack.c.l.b16 %v1285
    %v1322 = vunpack.c.l.b16 %v1286
    %v1323 = vunpack.c.l.b16 %v1287
    %v1324 = vunpack.c.l.b16 %v1288
    %v1325 = vunpack.c.l.b16 %v1289
    %v1326 = vunpack.c.l.b16 %v1290
    %v1327 = vunpack.c.l.b16 %v1291
    %v1328 = vunpack.c.l.b16 %v1292
    %v1329 = vunpack.c.l.b16 %v1293
    %v1330 = vunpack.c.l.b16 %v1294
    %v1331 = vunpack.c.l.b16 %v1295
    %v1332 = vunpack.c.l.b16 %v1296
    %v1333 = vunpack.c.l.b16 %v1297
    %v1334 = vunpack.c.l.b16 %v1298
    %v1335 = vunpack.c.l.b16 %v1299
    %v1336 = vunpack.c.l.b16 %v1300
    %v1337 = vpack.c.b16 %v1322, %v1321
    %v1338 = vpack.c.b16 %v1324, %v1323
    %v1339 = vpack.c.b16 %v1326, %v1325
    %v1340 = vpack.c.b16 %v1328, %v1327
    %v1341 = vpack.c.b16 %v1330, %v1329
    %v1342 = vpack.c.b16 %v1332, %v1331
    %v1343 = vpack.c.b16 %v1334, %v1333
    %v1344 = vpack.c.b16 %v1336, %v1335
    %1353 = vmatpush.bf16.msra.mxu0 %v1344
    %1354 = vmatpush.bf16.msra.mxu0 %v1343
    %1355 = vmatpush.bf16.msra.mxu0 %v1342
    %1356 = vmatpush.bf16.msra.mxu0 %v1341
    %1357 = vmatpush.bf16.msra.mxu0 %v1340
    %1358 = vmatpush.bf16.msra.mxu0 %v1339
    %1359 = vmatpush.bf16.msra.mxu0 %v1338
    %1360 = vmatpush.bf16.msra.mxu0 %v1337
    %1361 = vmatmul.bf16.gmra.mxu0 %v1281
    %v1362 = vpop.f32.mrf.mxu0
    %v1363 = vadd.f32 %v1303, %v1362
    %v1364 = vpop.f32.mrf.mxu0
    %v1365 = vadd.f32 %v1303, %v1364
    %1366 = vmatmul.bf16.gmra.mxu0 %v1282
    %v1367 = vpop.f32.mrf.mxu0
    %v1368 = vadd.f32 %v1303, %v1367
    %v1369 = vpop.f32.mrf.mxu0
    %v1370 = vadd.f32 %v1303, %v1369
    %1371 = vmatmul.bf16.gmra.mxu0 %v1283
    %v1372 = vpop.f32.mrf.mxu0
    %v1373 = vadd.f32 %v1303, %v1372
    %v1374 = vpop.f32.mrf.mxu0
    %v1375 = vadd.f32 %v1303, %v1374
    %1376 = vmatmul.bf16.gmra.mxu0 %v1284
    %v1377 = vpop.f32.mrf.mxu0
    %v1378 = vadd.f32 %v1303, %v1377
    %v1379 = vpop.f32.mrf.mxu0
    %v1380 = vadd.f32 %v1303, %v1379
    %1381 = vdwg.mxu0
    %v1382 = vld [vmem:[%s7] sm:$0x1]
    %v1383 = vxor.u32 %v1363, 2147483648
    %v1384 = vxor.u32 %v1365, 2147483648
    %v1385 = vxor.u32 %v1368, 2147483648
    %v1386 = vxor.u32 %v1370, 2147483648
    %v1387 = vxor.u32 %v1373, 2147483648
    %v1388 = vxor.u32 %v1375, 2147483648
    %v1389 = vxor.u32 %v1378, 2147483648
    %v1390 = vxor.u32 %v1380, 2147483648
    %v1391 = vmul.f32 %v1383, 1.442695
    %v1392 = vpow.pop %v1391
    %v1393 = vmul.f32 %v1384, 1.442695
    %v1394 = vpow.pop %v1393
    %v1395 = vmul.f32 %v1385, 1.442695
    %v1396 = vpow.pop %v1395
    %v1397 = vmul.f32 %v1386, 1.442695
    %v1398 = vpow.pop %v1397
    %v1399 = vmul.f32 %v1387, 1.442695
    %v1400 = vpow.pop %v1399
    %v1401 = vmul.f32 %v1388, 1.442695
    %v1402 = vpow.pop %v1401
    %v1403 = vmul.f32 %v1389, 1.442695
    %v1404 = vpow.pop %v1403
    %v1405 = vmul.f32 %v1390, 1.442695
    %v1406 = vpow.pop %v1405
    %v1407 = vadd.f32 %v1392, 1.0
    %v1408 = vadd.f32 %v1394, 1.0
    %v1409 = vadd.f32 %v1396, 1.0
    %v1410 = vadd.f32 %v1398, 1.0
    %v1411 = vadd.f32 %v1400, 1.0
    %v1412 = vadd.f32 %v1402, 1.0
    %v1413 = vadd.f32 %v1404, 1.0
    %v1414 = vadd.f32 %v1406, 1.0
    %v1415 = vrcp.pop %v1407
    %v1416 = vmul.f32 %v1407, %v1415
    %v1417 = vsub.f32 1.0, %v1416
    %v1418 = vmul.f32 %v1415, %v1417
    %v1419 = vadd.f32 %v1415, %v1418
    %vm1420 = vweird.f32 %v1407
    %vm1421 = vweird.f32 %v1415
    %vm1422 = vmor %vm1420, %vm1421
    %v1423 = vsel %vm1422, %v1415, %v1419
    %v1424 = vand.u32 2147483647, %v1407
    %vm1425 = vcmp.eq.f32.partialorder %v1424, 8.507059e+37
    %v1426 = vand.u32 %v1407, 2147483648
    %v1427 = vor.u32 1.1754944e-38, %v1426
    %v1428 = vsel %vm1425, %v1427, %v1423
    %v1429 = vmul.f32 1.0, %v1428
    %v1430 = vrcp.pop %v1408
    %v1431 = vmul.f32 %v1408, %v1430
    %v1432 = vsub.f32 1.0, %v1431
    %v1433 = vmul.f32 %v1430, %v1432
    %v1434 = vadd.f32 %v1430, %v1433
    %vm1435 = vweird.f32 %v1408
    %vm1436 = vweird.f32 %v1430
    %vm1437 = vmor %vm1435, %vm1436
    %v1438 = vsel %vm1437, %v1430, %v1434
    %v1439 = vand.u32 2147483647, %v1408
    %vm1440 = vcmp.eq.f32.partialorder %v1439, 8.507059e+37
    %v1441 = vand.u32 %v1408, 2147483648
    %v1442 = vor.u32 1.1754944e-38, %v1441
    %v1443 = vsel %vm1440, %v1442, %v1438
    %v1444 = vmul.f32 1.0, %v1443
    %v1445 = vrcp.pop %v1409
    %v1446 = vmul.f32 %v1409, %v1445
    %v1447 = vsub.f32 1.0, %v1446
    %v1448 = vmul.f32 %v1445, %v1447
    %v1449 = vadd.f32 %v1445, %v1448
    %vm1450 = vweird.f32 %v1409
    %vm1451 = vweird.f32 %v1445
    %vm1452 = vmor %vm1450, %vm1451
    %v1453 = vsel %vm1452, %v1445, %v1449
    %v1454 = vand.u32 2147483647, %v1409
    %vm1455 = vcmp.eq.f32.partialorder %v1454, 8.507059e+37
    %v1456 = vand.u32 %v1409, 2147483648
    %v1457 = vor.u32 1.1754944e-38, %v1456
    %v1458 = vsel %vm1455, %v1457, %v1453
    %v1459 = vmul.f32 1.0, %v1458
    %v1460 = vrcp.pop %v1410
    %v1461 = vmul.f32 %v1410, %v1460
    %v1462 = vsub.f32 1.0, %v1461
    %v1463 = vmul.f32 %v1460, %v1462
    %v1464 = vadd.f32 %v1460, %v1463
    %vm1465 = vweird.f32 %v1410
    %vm1466 = vweird.f32 %v1460
    %vm1467 = vmor %vm1465, %vm1466
    %v1468 = vsel %vm1467, %v1460, %v1464
    %v1469 = vand.u32 2147483647, %v1410
    %vm1470 = vcmp.eq.f32.partialorder %v1469, 8.507059e+37
    %v1471 = vand.u32 %v1410, 2147483648
    %v1472 = vor.u32 1.1754944e-38, %v1471
    %v1473 = vsel %vm1470, %v1472, %v1468
    %v1474 = vmul.f32 1.0, %v1473
    %v1475 = vrcp.pop %v1411
    %v1476 = vmul.f32 %v1411, %v1475
    %v1477 = vsub.f32 1.0, %v1476
    %v1478 = vmul.f32 %v1475, %v1477
    %v1479 = vadd.f32 %v1475, %v1478
    %vm1480 = vweird.f32 %v1411
    %vm1481 = vweird.f32 %v1475
    %vm1482 = vmor %vm1480, %vm1481
    %v1483 = vsel %vm1482, %v1475, %v1479
    %v1484 = vand.u32 2147483647, %v1411
    %vm1485 = vcmp.eq.f32.partialorder %v1484, 8.507059e+37
    %v1486 = vand.u32 %v1411, 2147483648
    %v1487 = vor.u32 1.1754944e-38, %v1486
    %v1488 = vsel %vm1485, %v1487, %v1483
    %v1489 = vmul.f32 1.0, %v1488
    %v1490 = vrcp.pop %v1412
    %v1491 = vmul.f32 %v1412, %v1490
    %v1492 = vsub.f32 1.0, %v1491
    %v1493 = vmul.f32 %v1490, %v1492
    %v1494 = vadd.f32 %v1490, %v1493
    %vm1495 = vweird.f32 %v1412
    %vm1496 = vweird.f32 %v1490
    %vm1497 = vmor %vm1495, %vm1496
    %v1498 = vsel %vm1497, %v1490, %v1494
    %v1499 = vand.u32 2147483647, %v1412
    %vm1500 = vcmp.eq.f32.partialorder %v1499, 8.507059e+37
    %v1501 = vand.u32 %v1412, 2147483648
    %v1502 = vor.u32 1.1754944e-38, %v1501
    %v1503 = vsel %vm1500, %v1502, %v1498
    %v1504 = vmul.f32 1.0, %v1503
    %v1505 = vrcp.pop %v1413
    %v1506 = vmul.f32 %v1413, %v1505
    %v1507 = vsub.f32 1.0, %v1506
    %v1508 = vmul.f32 %v1505, %v1507
    %v1509 = vadd.f32 %v1505, %v1508
    %vm1510 = vweird.f32 %v1413
    %vm1511 = vweird.f32 %v1505
    %vm1512 = vmor %vm1510, %vm1511
    %v1513 = vsel %vm1512, %v1505, %v1509
    %v1514 = vand.u32 2147483647, %v1413
    %vm1515 = vcmp.eq.f32.partialorder %v1514, 8.507059e+37
    %v1516 = vand.u32 %v1413, 2147483648
    %v1517 = vor.u32 1.1754944e-38, %v1516
    %v1518 = vsel %vm1515, %v1517, %v1513
    %v1519 = vmul.f32 1.0, %v1518
    %v1520 = vrcp.pop %v1414
    %v1521 = vmul.f32 %v1414, %v1520
    %v1522 = vsub.f32 1.0, %v1521
    %v1523 = vmul.f32 %v1520, %v1522
    %v1524 = vadd.f32 %v1520, %v1523
    %vm1525 = vweird.f32 %v1414
    %vm1526 = vweird.f32 %v1520
    %vm1527 = vmor %vm1525, %vm1526
    %v1528 = vsel %vm1527, %v1520, %v1524
    %v1529 = vand.u32 2147483647, %v1414
    %vm1530 = vcmp.eq.f32.partialorder %v1529, 8.507059e+37
    %v1531 = vand.u32 %v1414, 2147483648
    %v1532 = vor.u32 1.1754944e-38, %v1531
    %v1533 = vsel %vm1530, %v1532, %v1528
    %v1534 = vmul.f32 1.0, %v1533
    %v1535 = vsub.f32 %v1429, %v1363
    %v1536 = vsub.f32 %v1444, %v1365
    %v1537 = vsub.f32 %v1459, %v1368
    %v1538 = vsub.f32 %v1474, %v1370
    %v1539 = vsub.f32 %v1489, %v1373
    %v1540 = vsub.f32 %v1504, %v1375
    %v1541 = vsub.f32 %v1519, %v1378
    %v1542 = vsub.f32 %v1534, %v1380
    %v1544 = vperm.slane %v1382, 0
    %v1546 = vmul.f32 %v1544, %v1535
    %v1547 = vmul.f32 %v1544, %v1536
    %v1548 = vmul.f32 %v1544, %v1537
    %v1549 = vmul.f32 %v1544, %v1538
    %v1550 = vmul.f32 %v1544, %v1539
    %v1551 = vmul.f32 %v1544, %v1540
    %v1552 = vmul.f32 %v1544, %v1541
    %v1553 = vmul.f32 %v1544, %v1542
    %v1554 = vadd.f32 %v1363, %v1546
    %v1555 = vadd.f32 %v1365, %v1547
    %v1556 = vadd.f32 %v1368, %v1548
    %v1557 = vadd.f32 %v1370, %v1549
    %v1558 = vadd.f32 %v1373, %v1550
    %v1559 = vadd.f32 %v1375, %v1551
    %v1560 = vadd.f32 %v1378, %v1552
    %v1561 = vadd.f32 %v1380, %v1553
    %vm1562 = vcmask 48128
    %1563 = vst.msk [vmem:[%s8] sm:$0xff] %vm1562, %v1554
    %1564 = vst.msk [vmem:[%s8 + $0x8] sm:$0xff] %vm1562, %v1555
    %1565 = vst.msk [vmem:[%s8 + $0x10] sm:$0xff] %vm1562, %v1556
    %1566 = vst.msk [vmem:[%s8 + $0x18] sm:$0xff] %vm1562, %v1557
    %1567 = vst.msk [vmem:[%s8 + $0x20] sm:$0xff] %vm1562, %v1558
    %1568 = vst.msk [vmem:[%s8 + $0x28] sm:$0xff] %vm1562, %v1559
    %1569 = vst.msk [vmem:[%s8 + $0x30] sm:$0xff] %vm1562, %v1560
    %1570 = vst.msk [vmem:[%s8 + $0x38] sm:$0xff] %vm1562, %v1561
    // Predicated region
    $region42: #{tpu_custom_call.1} parent=1 // pred_check
      _
    $region43: #{tpu_custom_call.1} parent=1 // pred_check_branch
      %1572 = sbr.rel (0) target = $region45
    $region44: #{tpu_custom_call.1} parent=1 // pred_region
      _
    $region45: #{tpu_custom_call.1} parent=1 // pred_fallthru
      _
    // Predicated region
    $region46: #{tpu_custom_call.1} parent=1 // pred_check
      _
    $region47: #{tpu_custom_call.1} parent=1 // pred_check_branch
      %1574 = sbr.rel (0) target = $region49
    $region48: #{tpu_custom_call.1} parent=1 // pred_region
      _
    $region49: #{tpu_custom_call.1} parent=1 // pred_fallthru
      _
    %1575 = vsyncpa [#allocation4], 1
    %1576 = vsyncpa [#allocation6], 1

</llo_original>
